<compile_context>
chip_gen: v7x
topology: tpu7x:2x2x1
jax: 0.10.0
libtpu: 0.0.40
codegen_flags: <defaults>
</compile_context>

<pallas_src>
import math
import jax
import jax.numpy as jnp
from jax import lax
from jax.experimental import pallas as pl
from jax.experimental.pallas import tpu as pltpu

# ---- model hyper-params (small, consistent with the module's __init__) -------
NUM_TYPES = 16          # vocabulary size; pad_idx = NUM_TYPES
EMB_DIM = 32            # d_model
NHEAD = 4
HEAD_DIM = EMB_DIM // NHEAD
NUM_LAYERS = 2          # encoder_num_layers
DIM_FF = 2 * EMB_DIM    # dim_feedforward
MAX_LEN = 8             # sequence length
TOKENS_PER_EVENT = 3    # tokens averaged per event position
BATCH = 2
PAD_IDX = NUM_TYPES
LN_EPS = 1e-5
NEG_INF = -1e9          # large negative additive mask (stands in for -inf)
OUT_PAD = 128           # lane-dense output width (final linear padded 16 -> 128)
INV_SQRT_DH = 1.0 / math.sqrt(HEAD_DIM)

N_TOK = BATCH * MAX_LEN                     # batch folded into the token axis

# f32 vecs slab rows: per-layer biases/LN (8 each), then lin_b, then key-pad row
_ROWS_PER_LAYER = 8
LIN_B_ROW = NUM_LAYERS * _ROWS_PER_LAYER
PAD_ROW = LIN_B_ROW + 1
VEC_ROWS = PAD_ROW + 1
# bf16 weight slab rows: per layer [inW^T|outW^T] (D rows) + [ff1W^T|ff2W] (D rows),
# then padded linW^T (D rows)
LIN_W_ROW = NUM_LAYERS * 2 * EMB_DIM


def _ilog2(n):
    assert n > 0 and (n & (n - 1)) == 0, f"{n} must be a power of two"
    return n.bit_length() - 1


# in-kernel index math uses shifts/ands (guaranteed VPU lowering); requires pow2 sizes
_SH_S = _ilog2(MAX_LEN)
_SH_N = _ilog2(N_TOK)
_SH_H = _ilog2(HEAD_DIM)


# ---------------------------- shared math helpers ------------------------------
def _dot_nt(a, b):
    # a @ b.T with bf16 operands, f32 MXU accumulation
    return lax.dot_general(a.astype(jnp.bfloat16), b.astype(jnp.bfloat16),
                           (((1,), (1,)), ((), ())),
                           preferred_element_type=jnp.float32)


def _dot_nn(a, b):
    # a @ b with bf16 operands, f32 MXU accumulation
    return lax.dot_general(a.astype(jnp.bfloat16), b.astype(jnp.bfloat16),
                           (((1,), (0,)), ((), ())),
                           preferred_element_type=jnp.float32)


def _layer_norm(x, w, b, eps=LN_EPS):
    mu = jnp.mean(x, axis=-1, keepdims=True)
    var = jnp.mean((x - mu) ** 2, axis=-1, keepdims=True)
    return (x - mu) * lax.rsqrt(var + eps) * w + b


# ---------------------------- Pallas kernel -----------------------------------
def encoder_kernel(x_ref, w_ref, vec_ref, o_ref):
    N, D = x_ref.shape          # N = B*S tokens, D = emb_dim
    F = DIM_FF
    S = MAX_LEN
    HN = NHEAD * N

    x = x_ref[...]                                            # (N, D) f32

    # --- masks built in-kernel (no DMA): causal AND same-batch AND key-not-padded ---
    r = lax.broadcasted_iota(jnp.int32, (HN, N), 0)
    c = lax.broadcasted_iota(jnp.int32, (HN, N), 1)
    rt = r & (N - 1)                                          # query token within head block
    allowed = ((rt >> _SH_S) == (c >> _SH_S)) & ((c & (S - 1)) <= (rt & (S - 1)))
    pad_add = vec_ref[PAD_ROW:PAD_ROW + 1, 0:N]               # (1, N) additive key-pad row
    mask = jnp.where(allowed, 0.0, NEG_INF) + pad_add         # (HN, N) f32

    # 0/1 head-lane selector: row block h keeps only head h's lanes
    hmask = ((lax.broadcasted_iota(jnp.int32, (HN, D), 0) >> _SH_N)
             == (lax.broadcasted_iota(jnp.int32, (HN, D), 1) >> _SH_H)
             ).astype(jnp.float32)                            # (HN, D)

    for layer in range(NUM_LAYERS):                           # static unroll (2 layers)
        wb = layer * 2 * D
        vb = layer * _ROWS_PER_LAYER
        in_wt = w_ref[wb:wb + D, 0:3 * D]                     # (D, 3D) bf16 (Q pre-scaled)
        out_wt = w_ref[wb:wb + D, 3 * D:4 * D]                # (D, D)  bf16
        ff1_wt = w_ref[wb + D:wb + 2 * D, 0:F]                # (D, F)  bf16
        ff2_w = w_ref[wb + D:wb + 2 * D, F:2 * F]             # (D, F)  bf16 (native W2)
        in_b = vec_ref[vb + 0:vb + 1, 0:3 * D]
        out_b = vec_ref[vb + 1:vb + 2, 0:D]
        ln1_w = vec_ref[vb + 2:vb + 3, 0:D]
        ln1_b = vec_ref[vb + 3:vb + 4, 0:D]
        ln2_w = vec_ref[vb + 4:vb + 5, 0:D]
        ln2_b = vec_ref[vb + 5:vb + 6, 0:D]
        ff1_b = vec_ref[vb + 6:vb + 7, 0:F]
        ff2_b = vec_ref[vb + 7:vb + 8, 0:D]

        # fused QKV projection: one (N,D)x(D,3D) MXU pass; 1/sqrt(dh) folded into Q rows
        qkv = _dot_nn(x, in_wt) + in_b                        # (N, 3D) f32
        q = qkv[:, 0:D]
        k = qkv[:, D:2 * D]
        v = qkv[:, 2 * D:3 * D]

        # All heads at once: replicate q along sublane blocks (broadcast + 16-row
        # sublane-aligned reshape, no copy chains) and zero non-head lanes so a single
        # (HN, D) x (D, N) matmul yields every head's (N, N) score block.
        q_exp = jnp.broadcast_to(q[None], (NHEAD, N, D)).reshape(HN, D) * hmask
        s = _dot_nt(q_exp, k) + mask                          # (HN, N)
        s = s - jnp.max(s, axis=-1, keepdims=True)
        p = jnp.exp(s)
        p = p * pl.reciprocal(jnp.sum(p, axis=-1, keepdims=True), approx=True)
        o_all = _dot_nn(p, v) * hmask                         # (HN, D)

        # recombine heads (sublane-aligned blocks), then one output projection
        attn = o_all[0:N]
        for h in range(1, NHEAD):
            attn = attn + o_all[h * N:(h + 1) * N]            # (N, D)
        attn = _dot_nn(attn, out_wt) + out_b

        x = _layer_norm(x + attn, ln1_w, ln1_b)

        # feed-forward (relu); dropout = identity
        h1 = jnp.maximum(_dot_nn(x, ff1_wt) + ff1_b, 0.0)     # (N, F)
        h2 = _dot_nt(h1, ff2_w) + ff2_b                       # (N, D)
        x = _layer_norm(x + h2, ln2_w, ln2_b)

    # final linear, padded to 128 output lanes (unmasked lane-dense store)
    o_ref[...] = (_dot_nn(x, w_ref[LIN_W_ROW:LIN_W_ROW + D, :])
                  + vec_ref[LIN_B_ROW:LIN_B_ROW + 1, :])


# ------------------------------- packing / wrapper -----------------------------
def positional_encoding(maxlen, emb_size):
    den = jnp.exp(-jnp.arange(0, emb_size, 2, dtype=jnp.float32)
                  * math.log(10000.0) / emb_size)
    pos = jnp.arange(0, maxlen, dtype=jnp.float32).reshape(maxlen, 1)
    pe = jnp.zeros((maxlen, emb_size), jnp.float32)
    pe = pe.at[:, 0::2].set(jnp.sin(pos * den))
    pe = pe.at[:, 1::2].set(jnp.cos(pos * den))
    return pe


def pack_params(params):
    """ONE lane-major bf16 weight slab + ONE f32 bias/LN slab (packed once at setup)."""
    D, F, L = EMB_DIM, DIM_FF, NUM_LAYERS
    # fold 1/sqrt(head_dim) into the Q rows of the in-projection (weight pre-scaling)
    in_w = params["in_w"].at[:, :D, :].multiply(INV_SQRT_DH)
    in_b = params["in_b"].at[:, :D].multiply(INV_SQRT_DH)

    w_rows = []
    for l in range(L):
        w_rows.append(jnp.concatenate([in_w[l].T, params["out_w"][l].T], axis=1))            # (D, 4D)
        w_rows.append(jnp.concatenate([params["ff1_w"][l].T, params["ff2_w"][l]], axis=1))   # (D, 2F)
    w_rows.append(jnp.pad(params["lin_w"].T, ((0, 0), (0, OUT_PAD - NUM_TYPES))))            # (D, 128)
    w_slab = jnp.concatenate(w_rows, axis=0).astype(jnp.bfloat16)                            # (5D, 128)

    def row(v):
        v = v.reshape(1, -1)
        return jnp.pad(v, ((0, 0), (0, 128 - v.shape[1]))).astype(jnp.float32)

    vec_rows = []
    for l in range(L):
        for v in (in_b[l], params["out_b"][l], params["ln1_w"][l], params["ln1_b"][l],
                  params["ln2_w"][l], params["ln2_b"][l],
                  params["ff1_b"][l], params["ff2_b"][l]):
            vec_rows.append(row(v))
    vec_rows.append(row(params["lin_b"]))
    vecs_static = jnp.concatenate(vec_rows, axis=0)                                          # (17, 128)
    return w_slab, vecs_static


def make_forward(params, emb_table):
    """Embedding gather+mean, pos-enc, key-pad row and the Pallas kernel under ONE jit."""
    w_slab, vecs_static = pack_params(params)
    pe = positional_encoding(MAX_LEN, EMB_DIM)                # (S, D)

    @jax.jit
    def forward(events, pad_mask):
        # embedding gather + per-event mean (padded rows -> zero pad_vec) + pos enc
        emb = jnp.mean(emb_table[events], axis=2)             # (B, S, D)
        x2d = (emb + pe[None]).reshape(N_TOK, EMB_DIM).astype(jnp.float32)

        # key-padding additive row, appended to the static bias/LN slab
        pad_add = jnp.where(pad_mask.reshape(1, N_TOK), NEG_INF, 0.0).astype(jnp.float32)
        vecs = jnp.concatenate(
            [vecs_static, jnp.pad(pad_add, ((0, 0), (0, 128 - N_TOK)))], axis=0)  # (18, 128)

        vmem = pl.BlockSpec(memory_space=pltpu.MemorySpace.VMEM)
        out = pl.pallas_call(
            encoder_kernel,
            out_shape=jax.ShapeDtypeStruct((N_TOK, OUT_PAD), jnp.float32),
            in_specs=[vmem, vmem, vmem],
            out_specs=vmem,
        )(x2d, w_slab, vecs)
        return out[:, :NUM_TYPES].reshape(BATCH, MAX_LEN, NUM_TYPES)

    return forward


# ------------------------ pure-JAX reference (same math) ----------------------
def _ref_sample(x, fmask, pmask_add, params):
    D = x.shape[-1]
    Dh = HEAD_DIM
    for l in range(NUM_LAYERS):
        qkv = _dot_nt(x, params["in_w"][l]) + params["in_b"][l][None, :]
        q, k, v = qkv[:, :D], qkv[:, D:2 * D], qkv[:, 2 * D:]
        heads = []
        for h in range(NHEAD):
            sl = slice(h * Dh, (h + 1) * Dh)
            s = _dot_nt(q[:, sl], k[:, sl]) * INV_SQRT_DH
            s = s + fmask + pmask_add[None, :]
            s = s - s.max(-1, keepdims=True)
            p = jnp.exp(s)
            p = p / p.sum(-1, keepdims=True)
            heads.append(_dot_nn(p, v[:, sl]))
        attn = jnp.concatenate(heads, axis=-1)
        attn = _dot_nt(attn, params["out_w"][l]) + params["out_b"][l][None, :]
        x = _layer_norm(x + attn, params["ln1_w"][l], params["ln1_b"][l])
        h1 = jnp.maximum(_dot_nt(x, params["ff1_w"][l]) + params["ff1_b"][l][None, :], 0.0)
        h2 = _dot_nt(h1, params["ff2_w"][l]) + params["ff2_b"][l][None, :]
        x = _layer_norm(x + h2, params["ln2_w"][l], params["ln2_b"][l])
    return _dot_nt(x, params["lin_w"]) + params["lin_b"]


# ------------------------------- glue / setup ----------------------------------
def init_params(key):
    ks = jax.random.split(key, 12)
    L, D, F = NUM_LAYERS, EMB_DIM, DIM_FF

    def rnd(k, shape, fan_in):
        return jax.random.normal(k, shape, jnp.float32) / math.sqrt(fan_in)

    params = {
        "in_w":  rnd(ks[0], (L, 3 * D, D), D),
        "in_b":  rnd(ks[1], (L, 3 * D), D) * 0.1,
        "out_w": rnd(ks[2], (L, D, D), D),
        "out_b": rnd(ks[3], (L, D), D) * 0.1,
        "ln1_w": jnp.ones((L, D), jnp.float32),
        "ln1_b": jnp.zeros((L, D), jnp.float32),
        "ln2_w": jnp.ones((L, D), jnp.float32),
        "ln2_b": jnp.zeros((L, D), jnp.float32),
        "ff1_w": rnd(ks[4], (L, F, D), D),
        "ff1_b": rnd(ks[5], (L, F), D) * 0.1,
        "ff2_w": rnd(ks[6], (L, D, F), F),
        "ff2_b": rnd(ks[7], (L, D), F) * 0.1,
        "lin_w": rnd(ks[8], (NUM_TYPES, D), D),
        "lin_b": rnd(ks[9], (1, NUM_TYPES), D) * 0.1,
    }
    emb_table = jax.random.normal(ks[10], (NUM_TYPES + 1, D), jnp.float32) * 0.1
    emb_table = emb_table.at[PAD_IDX].set(0.0)   # padding_idx row = 0 (= pad_vec)
    return params, emb_table


if __name__ == "__main__":
    key = jax.random.PRNGKey(0)
    k_param, k_events = jax.random.split(key)
    params, emb_table = init_params(k_param)

    # events: (B, MAX_LEN, K) token ids; positions >= seq_len are padded (pad_idx)
    events = jax.random.randint(k_events, (BATCH, MAX_LEN, TOKENS_PER_EVENT),
                                0, NUM_TYPES, dtype=jnp.int32)
    seq_lens = jnp.array([6, MAX_LEN], dtype=jnp.int32)
    pos = jnp.arange(MAX_LEN)[None, :]                          # (1, S)
    pad_mask = pos >= seq_lens[:, None]                         # (B, S) True = pad
    events = jnp.where(pad_mask[:, :, None], PAD_IDX, events)

    forward = make_forward(params, emb_table)
    out = forward(events, pad_mask)
    out = jax.block_until_ready(out)
    assert out.shape == (BATCH, MAX_LEN, NUM_TYPES)

    # pure-JAX reference (per-sample masks, same math as the PyTorch module)
    emb = jnp.mean(emb_table[events], axis=2)                   # (B, S, D)
    x_emb = emb + positional_encoding(MAX_LEN, EMB_DIM)[None, :, :]
    future_mask = jnp.where(
        jnp.triu(jnp.ones((MAX_LEN, MAX_LEN), jnp.bool_), k=1), NEG_INF, 0.0
    ).astype(jnp.float32)
    pad_add_mask = jnp.where(pad_mask, NEG_INF, 0.0).astype(jnp.float32)
    ref = jax.vmap(lambda x, pm: _ref_sample(x, future_mask, pm, params))(
        x_emb, pad_add_mask)
    max_err = float(jnp.max(jnp.abs(out - ref)))
    assert jnp.allclose(out, ref, atol=2e-2, rtol=2e-2), max_err

    print("KERNEL_OK")
</pallas_src>

<mosaic_0001>
module attributes {stable_mosaic.version = 11 : i64} {
  func.func @encoder_kernel(%arg0: memref<16x32xf32, #tpu.memory_space<vmem>>, %arg1: memref<160x128xbf16, #tpu.memory_space<vmem>>, %arg2: memref<18x128xf32, #tpu.memory_space<vmem>>, %arg3: memref<16x128xf32, #tpu.memory_space<vmem>>) attributes {dimension_semantics = [], scalar_prefetch = 0 : i64, scratch_operands = 0 : i64, tpu.core_type = #tpu.core_type<tc>} {
    %c0 = arith.constant 0 : index
    %c0_0 = arith.constant 0 : index
    %0 = vector.load %arg0[%c0, %c0_0] : memref<16x32xf32, #tpu.memory_space<vmem>>, vector<16x32xf32>
    %1 = tpu.iota {dimensions = array<i32: 0>} : vector<64x16xi32>
    %2 = tpu.iota {dimensions = array<i32: 1>} : vector<64x16xi32>
    %c15_i32 = arith.constant 15 : i32
    %3 = vector.broadcast %c15_i32 : i32 to vector<64x16xi32>
    %4 = arith.andi %1, %3 : vector<64x16xi32>
    %c3_i32 = arith.constant 3 : i32
    %5 = vector.broadcast %c3_i32 : i32 to vector<64x16xi32>
    %6 = arith.shrsi %4, %5 : vector<64x16xi32>
    %c3_i32_1 = arith.constant 3 : i32
    %7 = vector.broadcast %c3_i32_1 : i32 to vector<64x16xi32>
    %8 = arith.shrsi %2, %7 : vector<64x16xi32>
    %9 = arith.cmpi eq, %6, %8 : vector<64x16xi32>
    %c7_i32 = arith.constant 7 : i32
    %10 = vector.broadcast %c7_i32 : i32 to vector<64x16xi32>
    %11 = arith.andi %2, %10 : vector<64x16xi32>
    %c7_i32_2 = arith.constant 7 : i32
    %12 = vector.broadcast %c7_i32_2 : i32 to vector<64x16xi32>
    %13 = arith.andi %4, %12 : vector<64x16xi32>
    %14 = arith.cmpi sle, %11, %13 : vector<64x16xi32>
    %15 = arith.andi %9, %14 : vector<64x16xi1>
    %c17 = arith.constant 17 : index
    %c0_3 = arith.constant 0 : index
    %16 = vector.load %arg2[%c17, %c0_3] : memref<18x128xf32, #tpu.memory_space<vmem>>, vector<1x16xf32>
    %cst = arith.constant 0.000000e+00 : f32
    %cst_4 = arith.constant -1.000000e+09 : f32
    %17 = vector.broadcast %cst : f32 to vector<64x16xf32>
    %18 = vector.broadcast %cst_4 : f32 to vector<64x16xf32>
    %19 = arith.select %15, %17, %18 : vector<64x16xi1>, vector<64x16xf32>
    %20 = vector.broadcast %16 : vector<1x16xf32> to vector<64x16xf32>
    %21 = arith.addf %19, %20 : vector<64x16xf32>
    %22 = tpu.iota {dimensions = array<i32: 0>} : vector<64x32xi32>
    %c4_i32 = arith.constant 4 : i32
    %23 = vector.broadcast %c4_i32 : i32 to vector<64x32xi32>
    %24 = arith.shrsi %22, %23 : vector<64x32xi32>
    %25 = tpu.iota {dimensions = array<i32: 1>} : vector<64x32xi32>
    %c3_i32_5 = arith.constant 3 : i32
    %26 = vector.broadcast %c3_i32_5 : i32 to vector<64x32xi32>
    %27 = arith.shrsi %25, %26 : vector<64x32xi32>
    %28 = arith.cmpi eq, %24, %27 : vector<64x32xi32>
    %29 = arith.extui %28 : vector<64x32xi1> to vector<64x32xi32>
    %30 = arith.sitofp %29 : vector<64x32xi32> to vector<64x32xf32>
    %c0_6 = arith.constant 0 : index
    %c0_7 = arith.constant 0 : index
    %31 = vector.load %arg1[%c0_6, %c0_7] : memref<160x128xbf16, #tpu.memory_space<vmem>>, vector<32x96xbf16>
    %c0_8 = arith.constant 0 : index
    %c96 = arith.constant 96 : index
    %32 = vector.load %arg1[%c0_8, %c96] : memref<160x128xbf16, #tpu.memory_space<vmem>>, vector<32x32xbf16>
    %c32 = arith.constant 32 : index
    %c0_9 = arith.constant 0 : index
    %33 = vector.load %arg1[%c32, %c0_9] : memref<160x128xbf16, #tpu.memory_space<vmem>>, vector<32x64xbf16>
    %c32_10 = arith.constant 32 : index
    %c64 = arith.constant 64 : index
    %34 = vector.load %arg1[%c32_10, %c64] : memref<160x128xbf16, #tpu.memory_space<vmem>>, vector<32x64xbf16>
    %c0_11 = arith.constant 0 : index
    %c0_12 = arith.constant 0 : index
    %35 = vector.load %arg2[%c0_11, %c0_12] : memref<18x128xf32, #tpu.memory_space<vmem>>, vector<1x96xf32>
    %c1 = arith.constant 1 : index
    %c0_13 = arith.constant 0 : index
    %36 = vector.load %arg2[%c1, %c0_13] : memref<18x128xf32, #tpu.memory_space<vmem>>, vector<1x32xf32>
    %c2 = arith.constant 2 : index
    %c0_14 = arith.constant 0 : index
    %37 = vector.load %arg2[%c2, %c0_14] : memref<18x128xf32, #tpu.memory_space<vmem>>, vector<1x32xf32>
    %c3 = arith.constant 3 : index
    %c0_15 = arith.constant 0 : index
    %38 = vector.load %arg2[%c3, %c0_15] : memref<18x128xf32, #tpu.memory_space<vmem>>, vector<1x32xf32>
    %c4 = arith.constant 4 : index
    %c0_16 = arith.constant 0 : index
    %39 = vector.load %arg2[%c4, %c0_16] : memref<18x128xf32, #tpu.memory_space<vmem>>, vector<1x32xf32>
    %c5 = arith.constant 5 : index
    %c0_17 = arith.constant 0 : index
    %40 = vector.load %arg2[%c5, %c0_17] : memref<18x128xf32, #tpu.memory_space<vmem>>, vector<1x32xf32>
    %c6 = arith.constant 6 : index
    %c0_18 = arith.constant 0 : index
    %41 = vector.load %arg2[%c6, %c0_18] : memref<18x128xf32, #tpu.memory_space<vmem>>, vector<1x64xf32>
    %c7 = arith.constant 7 : index
    %c0_19 = arith.constant 0 : index
    %42 = vector.load %arg2[%c7, %c0_19] : memref<18x128xf32, #tpu.memory_space<vmem>>, vector<1x32xf32>
    %43 = arith.truncf %0 : vector<16x32xf32> to vector<16x32xbf16>
    %cst_20 = arith.constant dense<0.000000e+00> : vector<16x96xf32>
    %44 = tpu.matmul %43, %31, %cst_20 {dimension_numbers = #tpu.dot_dimension_numbers<[1], [0], [0], [1], [0, 0, 1, 1], [], []>} : vector<16x32xbf16>, vector<32x96xbf16>, vector<16x96xf32> -> vector<16x96xf32>
    %45 = vector.broadcast %35 : vector<1x96xf32> to vector<16x96xf32>
    %46 = arith.addf %44, %45 : vector<16x96xf32>
    %47 = vector.extract_strided_slice %46 {offsets = [0, 0], sizes = [16, 32], strides = [1, 1]} : vector<16x96xf32> to vector<16x32xf32>
    %48 = vector.extract_strided_slice %46 {offsets = [0, 32], sizes = [16, 32], strides = [1, 1]} : vector<16x96xf32> to vector<16x32xf32>
    %49 = vector.extract_strided_slice %46 {offsets = [0, 64], sizes = [16, 32], strides = [1, 1]} : vector<16x96xf32> to vector<16x32xf32>
    %50 = vector.shape_cast %47 : vector<16x32xf32> to vector<1x16x32xf32>
    %51 = vector.shape_cast %50 : vector<1x16x32xf32> to vector<1x16x32xf32>
    %52 = vector.broadcast %51 : vector<1x16x32xf32> to vector<4x16x32xf32>
    %53 = vector.shape_cast %52 : vector<4x16x32xf32> to vector<64x32xf32>
    %54 = arith.mulf %53, %30 : vector<64x32xf32>
    %55 = arith.truncf %54 : vector<64x32xf32> to vector<64x32xbf16>
    %56 = arith.truncf %48 : vector<16x32xf32> to vector<16x32xbf16>
    %cst_21 = arith.constant dense<0.000000e+00> : vector<64x16xf32>
    %57 = tpu.matmul %55, %56, %cst_21 {dimension_numbers = #tpu.dot_dimension_numbers<[1], [1], [0], [0], [0, 0, 1, 0], [], []>} : vector<64x32xbf16>, vector<16x32xbf16>, vector<64x16xf32> -> vector<64x16xf32>
    %58 = arith.addf %57, %21 : vector<64x16xf32>
    %cst_22 = arith.constant dense<0xFF800000> : vector<64xf32>
    %59 = vector.multi_reduction <maximumf>, %58, %cst_22 [1] : vector<64x16xf32> to vector<64xf32>
    %60 = vector.shape_cast %59 : vector<64xf32> to vector<64x1xf32>
    %61 = vector.broadcast %60 : vector<64x1xf32> to vector<64x16xf32>
    %62 = arith.subf %58, %61 : vector<64x16xf32>
    %63 = math.exp %62 : vector<64x16xf32>
    %cst_23 = arith.constant dense<0.000000e+00> : vector<64xf32>
    %64 = vector.multi_reduction <add>, %63, %cst_23 [1] : vector<64x16xf32> to vector<64xf32>
    %65 = vector.shape_cast %64 : vector<64xf32> to vector<64x1xf32>
    %66 = tpu.reciprocal %65 {approx = true} : vector<64x1xf32> -> vector<64x1xf32>
    %67 = vector.broadcast %66 : vector<64x1xf32> to vector<64x16xf32>
    %68 = arith.mulf %63, %67 : vector<64x16xf32>
    %69 = arith.truncf %68 : vector<64x16xf32> to vector<64x16xbf16>
    %70 = arith.truncf %49 : vector<16x32xf32> to vector<16x32xbf16>
    %cst_24 = arith.constant dense<0.000000e+00> : vector<64x32xf32>
    %71 = tpu.matmul %69, %70, %cst_24 {dimension_numbers = #tpu.dot_dimension_numbers<[1], [0], [0], [1], [0, 0, 1, 1], [], []>} : vector<64x16xbf16>, vector<16x32xbf16>, vector<64x32xf32> -> vector<64x32xf32>
    %72 = arith.mulf %71, %30 : vector<64x32xf32>
    %73 = vector.extract_strided_slice %72 {offsets = [0, 0], sizes = [16, 32], strides = [1, 1]} : vector<64x32xf32> to vector<16x32xf32>
    %74 = vector.extract_strided_slice %72 {offsets = [16, 0], sizes = [16, 32], strides = [1, 1]} : vector<64x32xf32> to vector<16x32xf32>
    %75 = arith.addf %73, %74 : vector<16x32xf32>
    %76 = vector.extract_strided_slice %72 {offsets = [32, 0], sizes = [16, 32], strides = [1, 1]} : vector<64x32xf32> to vector<16x32xf32>
    %77 = arith.addf %75, %76 : vector<16x32xf32>
    %78 = vector.extract_strided_slice %72 {offsets = [48, 0], sizes = [16, 32], strides = [1, 1]} : vector<64x32xf32> to vector<16x32xf32>
    %79 = arith.addf %77, %78 : vector<16x32xf32>
    %80 = arith.truncf %79 : vector<16x32xf32> to vector<16x32xbf16>
    %cst_25 = arith.constant dense<0.000000e+00> : vector<16x32xf32>
    %81 = tpu.matmul %80, %32, %cst_25 {dimension_numbers = #tpu.dot_dimension_numbers<[1], [0], [0], [1], [0, 0, 1, 1], [], []>} : vector<16x32xbf16>, vector<32x32xbf16>, vector<16x32xf32> -> vector<16x32xf32>
    %82 = vector.broadcast %36 : vector<1x32xf32> to vector<16x32xf32>
    %83 = arith.addf %81, %82 : vector<16x32xf32>
    %84 = arith.addf %0, %83 : vector<16x32xf32>
    %cst_26 = arith.constant dense<0.000000e+00> : vector<16xf32>
    %85 = vector.multi_reduction <add>, %84, %cst_26 [1] : vector<16x32xf32> to vector<16xf32>
    %86 = vector.shape_cast %85 : vector<16xf32> to vector<16x1xf32>
    %cst_27 = arith.constant 3.200000e+01 : f32
    %87 = vector.broadcast %cst_27 : f32 to vector<16x1xf32>
    %88 = arith.divf %86, %87 : vector<16x1xf32>
    %89 = vector.broadcast %88 : vector<16x1xf32> to vector<16x32xf32>
    %90 = arith.subf %84, %89 : vector<16x32xf32>
    %91 = arith.mulf %90, %90 : vector<16x32xf32>
    %cst_28 = arith.constant dense<0.000000e+00> : vector<16xf32>
    %92 = vector.multi_reduction <add>, %91, %cst_28 [1] : vector<16x32xf32> to vector<16xf32>
    %93 = vector.shape_cast %92 : vector<16xf32> to vector<16x1xf32>
    %cst_29 = arith.constant 3.200000e+01 : f32
    %94 = vector.broadcast %cst_29 : f32 to vector<16x1xf32>
    %95 = arith.divf %93, %94 : vector<16x1xf32>
    %96 = vector.broadcast %88 : vector<16x1xf32> to vector<16x32xf32>
    %97 = arith.subf %84, %96 : vector<16x32xf32>
    %cst_30 = arith.constant 9.99999974E-6 : f32
    %98 = vector.broadcast %cst_30 : f32 to vector<16x1xf32>
    %99 = arith.addf %95, %98 : vector<16x1xf32>
    %100 = math.rsqrt %99 : vector<16x1xf32>
    %101 = vector.broadcast %100 : vector<16x1xf32> to vector<16x32xf32>
    %102 = arith.mulf %97, %101 : vector<16x32xf32>
    %103 = vector.broadcast %37 : vector<1x32xf32> to vector<16x32xf32>
    %104 = arith.mulf %102, %103 : vector<16x32xf32>
    %105 = vector.broadcast %38 : vector<1x32xf32> to vector<16x32xf32>
    %106 = arith.addf %104, %105 : vector<16x32xf32>
    %107 = arith.truncf %106 : vector<16x32xf32> to vector<16x32xbf16>
    %cst_31 = arith.constant dense<0.000000e+00> : vector<16x64xf32>
    %108 = tpu.matmul %107, %33, %cst_31 {dimension_numbers = #tpu.dot_dimension_numbers<[1], [0], [0], [1], [0, 0, 1, 1], [], []>} : vector<16x32xbf16>, vector<32x64xbf16>, vector<16x64xf32> -> vector<16x64xf32>
    %109 = vector.broadcast %41 : vector<1x64xf32> to vector<16x64xf32>
    %110 = arith.addf %108, %109 : vector<16x64xf32>
    %cst_32 = arith.constant 0.000000e+00 : f32
    %111 = vector.broadcast %cst_32 : f32 to vector<16x64xf32>
    %112 = arith.maximumf %110, %111 : vector<16x64xf32>
    %113 = arith.truncf %112 : vector<16x64xf32> to vector<16x64xbf16>
    %cst_33 = arith.constant dense<0.000000e+00> : vector<16x32xf32>
    %114 = tpu.matmul %113, %34, %cst_33 {dimension_numbers = #tpu.dot_dimension_numbers<[1], [1], [0], [0], [0, 0, 1, 0], [], []>} : vector<16x64xbf16>, vector<32x64xbf16>, vector<16x32xf32> -> vector<16x32xf32>
    %115 = vector.broadcast %42 : vector<1x32xf32> to vector<16x32xf32>
    %116 = arith.addf %114, %115 : vector<16x32xf32>
    %117 = arith.addf %106, %116 : vector<16x32xf32>
    %cst_34 = arith.constant dense<0.000000e+00> : vector<16xf32>
    %118 = vector.multi_reduction <add>, %117, %cst_34 [1] : vector<16x32xf32> to vector<16xf32>
    %119 = vector.shape_cast %118 : vector<16xf32> to vector<16x1xf32>
    %cst_35 = arith.constant 3.200000e+01 : f32
    %120 = vector.broadcast %cst_35 : f32 to vector<16x1xf32>
    %121 = arith.divf %119, %120 : vector<16x1xf32>
    %122 = vector.broadcast %121 : vector<16x1xf32> to vector<16x32xf32>
    %123 = arith.subf %117, %122 : vector<16x32xf32>
    %124 = arith.mulf %123, %123 : vector<16x32xf32>
    %cst_36 = arith.constant dense<0.000000e+00> : vector<16xf32>
    %125 = vector.multi_reduction <add>, %124, %cst_36 [1] : vector<16x32xf32> to vector<16xf32>
    %126 = vector.shape_cast %125 : vector<16xf32> to vector<16x1xf32>
    %cst_37 = arith.constant 3.200000e+01 : f32
    %127 = vector.broadcast %cst_37 : f32 to vector<16x1xf32>
    %128 = arith.divf %126, %127 : vector<16x1xf32>
    %129 = vector.broadcast %121 : vector<16x1xf32> to vector<16x32xf32>
    %130 = arith.subf %117, %129 : vector<16x32xf32>
    %cst_38 = arith.constant 9.99999974E-6 : f32
    %131 = vector.broadcast %cst_38 : f32 to vector<16x1xf32>
    %132 = arith.addf %128, %131 : vector<16x1xf32>
    %133 = math.rsqrt %132 : vector<16x1xf32>
    %134 = vector.broadcast %133 : vector<16x1xf32> to vector<16x32xf32>
    %135 = arith.mulf %130, %134 : vector<16x32xf32>
    %136 = vector.broadcast %39 : vector<1x32xf32> to vector<16x32xf32>
    %137 = arith.mulf %135, %136 : vector<16x32xf32>
    %138 = vector.broadcast %40 : vector<1x32xf32> to vector<16x32xf32>
    %139 = arith.addf %137, %138 : vector<16x32xf32>
    %c64_39 = arith.constant 64 : index
    %c0_40 = arith.constant 0 : index
    %140 = vector.load %arg1[%c64_39, %c0_40] : memref<160x128xbf16, #tpu.memory_space<vmem>>, vector<32x96xbf16>
    %c64_41 = arith.constant 64 : index
    %c96_42 = arith.constant 96 : index
    %141 = vector.load %arg1[%c64_41, %c96_42] : memref<160x128xbf16, #tpu.memory_space<vmem>>, vector<32x32xbf16>
    %c96_43 = arith.constant 96 : index
    %c0_44 = arith.constant 0 : index
    %142 = vector.load %arg1[%c96_43, %c0_44] : memref<160x128xbf16, #tpu.memory_space<vmem>>, vector<32x64xbf16>
    %c96_45 = arith.constant 96 : index
    %c64_46 = arith.constant 64 : index
    %143 = vector.load %arg1[%c96_45, %c64_46] : memref<160x128xbf16, #tpu.memory_space<vmem>>, vector<32x64xbf16>
    %c8 = arith.constant 8 : index
    %c0_47 = arith.constant 0 : index
    %144 = vector.load %arg2[%c8, %c0_47] : memref<18x128xf32, #tpu.memory_space<vmem>>, vector<1x96xf32>
    %c9 = arith.constant 9 : index
    %c0_48 = arith.constant 0 : index
    %145 = vector.load %arg2[%c9, %c0_48] : memref<18x128xf32, #tpu.memory_space<vmem>>, vector<1x32xf32>
    %c10 = arith.constant 10 : index
    %c0_49 = arith.constant 0 : index
    %146 = vector.load %arg2[%c10, %c0_49] : memref<18x128xf32, #tpu.memory_space<vmem>>, vector<1x32xf32>
    %c11 = arith.constant 11 : index
    %c0_50 = arith.constant 0 : index
    %147 = vector.load %arg2[%c11, %c0_50] : memref<18x128xf32, #tpu.memory_space<vmem>>, vector<1x32xf32>
    %c12 = arith.constant 12 : index
    %c0_51 = arith.constant 0 : index
    %148 = vector.load %arg2[%c12, %c0_51] : memref<18x128xf32, #tpu.memory_space<vmem>>, vector<1x32xf32>
    %c13 = arith.constant 13 : index
    %c0_52 = arith.constant 0 : index
    %149 = vector.load %arg2[%c13, %c0_52] : memref<18x128xf32, #tpu.memory_space<vmem>>, vector<1x32xf32>
    %c14 = arith.constant 14 : index
    %c0_53 = arith.constant 0 : index
    %150 = vector.load %arg2[%c14, %c0_53] : memref<18x128xf32, #tpu.memory_space<vmem>>, vector<1x64xf32>
    %c15 = arith.constant 15 : index
    %c0_54 = arith.constant 0 : index
    %151 = vector.load %arg2[%c15, %c0_54] : memref<18x128xf32, #tpu.memory_space<vmem>>, vector<1x32xf32>
    %152 = arith.truncf %139 : vector<16x32xf32> to vector<16x32xbf16>
    %cst_55 = arith.constant dense<0.000000e+00> : vector<16x96xf32>
    %153 = tpu.matmul %152, %140, %cst_55 {dimension_numbers = #tpu.dot_dimension_numbers<[1], [0], [0], [1], [0, 0, 1, 1], [], []>} : vector<16x32xbf16>, vector<32x96xbf16>, vector<16x96xf32> -> vector<16x96xf32>
    %154 = vector.broadcast %144 : vector<1x96xf32> to vector<16x96xf32>
    %155 = arith.addf %153, %154 : vector<16x96xf32>
    %156 = vector.extract_strided_slice %155 {offsets = [0, 0], sizes = [16, 32], strides = [1, 1]} : vector<16x96xf32> to vector<16x32xf32>
    %157 = vector.extract_strided_slice %155 {offsets = [0, 32], sizes = [16, 32], strides = [1, 1]} : vector<16x96xf32> to vector<16x32xf32>
    %158 = vector.extract_strided_slice %155 {offsets = [0, 64], sizes = [16, 32], strides = [1, 1]} : vector<16x96xf32> to vector<16x32xf32>
    %159 = vector.shape_cast %156 : vector<16x32xf32> to vector<1x16x32xf32>
    %160 = vector.shape_cast %159 : vector<1x16x32xf32> to vector<1x16x32xf32>
    %161 = vector.broadcast %160 : vector<1x16x32xf32> to vector<4x16x32xf32>
    %162 = vector.shape_cast %161 : vector<4x16x32xf32> to vector<64x32xf32>
    %163 = arith.mulf %162, %30 : vector<64x32xf32>
    %164 = arith.truncf %163 : vector<64x32xf32> to vector<64x32xbf16>
    %165 = arith.truncf %157 : vector<16x32xf32> to vector<16x32xbf16>
    %cst_56 = arith.constant dense<0.000000e+00> : vector<64x16xf32>
    %166 = tpu.matmul %164, %165, %cst_56 {dimension_numbers = #tpu.dot_dimension_numbers<[1], [1], [0], [0], [0, 0, 1, 0], [], []>} : vector<64x32xbf16>, vector<16x32xbf16>, vector<64x16xf32> -> vector<64x16xf32>
    %167 = arith.addf %166, %21 : vector<64x16xf32>
    %cst_57 = arith.constant dense<0xFF800000> : vector<64xf32>
    %168 = vector.multi_reduction <maximumf>, %167, %cst_57 [1] : vector<64x16xf32> to vector<64xf32>
    %169 = vector.shape_cast %168 : vector<64xf32> to vector<64x1xf32>
    %170 = vector.broadcast %169 : vector<64x1xf32> to vector<64x16xf32>
    %171 = arith.subf %167, %170 : vector<64x16xf32>
    %172 = math.exp %171 : vector<64x16xf32>
    %cst_58 = arith.constant dense<0.000000e+00> : vector<64xf32>
    %173 = vector.multi_reduction <add>, %172, %cst_58 [1] : vector<64x16xf32> to vector<64xf32>
    %174 = vector.shape_cast %173 : vector<64xf32> to vector<64x1xf32>
    %175 = tpu.reciprocal %174 {approx = true} : vector<64x1xf32> -> vector<64x1xf32>
    %176 = vector.broadcast %175 : vector<64x1xf32> to vector<64x16xf32>
    %177 = arith.mulf %172, %176 : vector<64x16xf32>
    %178 = arith.truncf %177 : vector<64x16xf32> to vector<64x16xbf16>
    %179 = arith.truncf %158 : vector<16x32xf32> to vector<16x32xbf16>
    %cst_59 = arith.constant dense<0.000000e+00> : vector<64x32xf32>
    %180 = tpu.matmul %178, %179, %cst_59 {dimension_numbers = #tpu.dot_dimension_numbers<[1], [0], [0], [1], [0, 0, 1, 1], [], []>} : vector<64x16xbf16>, vector<16x32xbf16>, vector<64x32xf32> -> vector<64x32xf32>
    %181 = arith.mulf %180, %30 : vector<64x32xf32>
    %182 = vector.extract_strided_slice %181 {offsets = [0, 0], sizes = [16, 32], strides = [1, 1]} : vector<64x32xf32> to vector<16x32xf32>
    %183 = vector.extract_strided_slice %181 {offsets = [16, 0], sizes = [16, 32], strides = [1, 1]} : vector<64x32xf32> to vector<16x32xf32>
    %184 = arith.addf %182, %183 : vector<16x32xf32>
    %185 = vector.extract_strided_slice %181 {offsets = [32, 0], sizes = [16, 32], strides = [1, 1]} : vector<64x32xf32> to vector<16x32xf32>
    %186 = arith.addf %184, %185 : vector<16x32xf32>
    %187 = vector.extract_strided_slice %181 {offsets = [48, 0], sizes = [16, 32], strides = [1, 1]} : vector<64x32xf32> to vector<16x32xf32>
    %188 = arith.addf %186, %187 : vector<16x32xf32>
    %189 = arith.truncf %188 : vector<16x32xf32> to vector<16x32xbf16>
    %cst_60 = arith.constant dense<0.000000e+00> : vector<16x32xf32>
    %190 = tpu.matmul %189, %141, %cst_60 {dimension_numbers = #tpu.dot_dimension_numbers<[1], [0], [0], [1], [0, 0, 1, 1], [], []>} : vector<16x32xbf16>, vector<32x32xbf16>, vector<16x32xf32> -> vector<16x32xf32>
    %191 = vector.broadcast %145 : vector<1x32xf32> to vector<16x32xf32>
    %192 = arith.addf %190, %191 : vector<16x32xf32>
    %193 = arith.addf %139, %192 : vector<16x32xf32>
    %cst_61 = arith.constant dense<0.000000e+00> : vector<16xf32>
    %194 = vector.multi_reduction <add>, %193, %cst_61 [1] : vector<16x32xf32> to vector<16xf32>
    %195 = vector.shape_cast %194 : vector<16xf32> to vector<16x1xf32>
    %cst_62 = arith.constant 3.200000e+01 : f32
    %196 = vector.broadcast %cst_62 : f32 to vector<16x1xf32>
    %197 = arith.divf %195, %196 : vector<16x1xf32>
    %198 = vector.broadcast %197 : vector<16x1xf32> to vector<16x32xf32>
    %199 = arith.subf %193, %198 : vector<16x32xf32>
    %200 = arith.mulf %199, %199 : vector<16x32xf32>
    %cst_63 = arith.constant dense<0.000000e+00> : vector<16xf32>
    %201 = vector.multi_reduction <add>, %200, %cst_63 [1] : vector<16x32xf32> to vector<16xf32>
    %202 = vector.shape_cast %201 : vector<16xf32> to vector<16x1xf32>
    %cst_64 = arith.constant 3.200000e+01 : f32
    %203 = vector.broadcast %cst_64 : f32 to vector<16x1xf32>
    %204 = arith.divf %202, %203 : vector<16x1xf32>
    %205 = vector.broadcast %197 : vector<16x1xf32> to vector<16x32xf32>
    %206 = arith.subf %193, %205 : vector<16x32xf32>
    %cst_65 = arith.constant 9.99999974E-6 : f32
    %207 = vector.broadcast %cst_65 : f32 to vector<16x1xf32>
    %208 = arith.addf %204, %207 : vector<16x1xf32>
    %209 = math.rsqrt %208 : vector<16x1xf32>
    %210 = vector.broadcast %209 : vector<16x1xf32> to vector<16x32xf32>
    %211 = arith.mulf %206, %210 : vector<16x32xf32>
    %212 = vector.broadcast %146 : vector<1x32xf32> to vector<16x32xf32>
    %213 = arith.mulf %211, %212 : vector<16x32xf32>
    %214 = vector.broadcast %147 : vector<1x32xf32> to vector<16x32xf32>
    %215 = arith.addf %213, %214 : vector<16x32xf32>
    %216 = arith.truncf %215 : vector<16x32xf32> to vector<16x32xbf16>
    %cst_66 = arith.constant dense<0.000000e+00> : vector<16x64xf32>
    %217 = tpu.matmul %216, %142, %cst_66 {dimension_numbers = #tpu.dot_dimension_numbers<[1], [0], [0], [1], [0, 0, 1, 1], [], []>} : vector<16x32xbf16>, vector<32x64xbf16>, vector<16x64xf32> -> vector<16x64xf32>
    %218 = vector.broadcast %150 : vector<1x64xf32> to vector<16x64xf32>
    %219 = arith.addf %217, %218 : vector<16x64xf32>
    %cst_67 = arith.constant 0.000000e+00 : f32
    %220 = vector.broadcast %cst_67 : f32 to vector<16x64xf32>
    %221 = arith.maximumf %219, %220 : vector<16x64xf32>
    %222 = arith.truncf %221 : vector<16x64xf32> to vector<16x64xbf16>
    %cst_68 = arith.constant dense<0.000000e+00> : vector<16x32xf32>
    %223 = tpu.matmul %222, %143, %cst_68 {dimension_numbers = #tpu.dot_dimension_numbers<[1], [1], [0], [0], [0, 0, 1, 0], [], []>} : vector<16x64xbf16>, vector<32x64xbf16>, vector<16x32xf32> -> vector<16x32xf32>
    %224 = vector.broadcast %151 : vector<1x32xf32> to vector<16x32xf32>
    %225 = arith.addf %223, %224 : vector<16x32xf32>
    %226 = arith.addf %215, %225 : vector<16x32xf32>
    %cst_69 = arith.constant dense<0.000000e+00> : vector<16xf32>
    %227 = vector.multi_reduction <add>, %226, %cst_69 [1] : vector<16x32xf32> to vector<16xf32>
    %228 = vector.shape_cast %227 : vector<16xf32> to vector<16x1xf32>
    %cst_70 = arith.constant 3.200000e+01 : f32
    %229 = vector.broadcast %cst_70 : f32 to vector<16x1xf32>
    %230 = arith.divf %228, %229 : vector<16x1xf32>
    %231 = vector.broadcast %230 : vector<16x1xf32> to vector<16x32xf32>
    %232 = arith.subf %226, %231 : vector<16x32xf32>
    %233 = arith.mulf %232, %232 : vector<16x32xf32>
    %cst_71 = arith.constant dense<0.000000e+00> : vector<16xf32>
    %234 = vector.multi_reduction <add>, %233, %cst_71 [1] : vector<16x32xf32> to vector<16xf32>
    %235 = vector.shape_cast %234 : vector<16xf32> to vector<16x1xf32>
    %cst_72 = arith.constant 3.200000e+01 : f32
    %236 = vector.broadcast %cst_72 : f32 to vector<16x1xf32>
    %237 = arith.divf %235, %236 : vector<16x1xf32>
    %238 = vector.broadcast %230 : vector<16x1xf32> to vector<16x32xf32>
    %239 = arith.subf %226, %238 : vector<16x32xf32>
    %cst_73 = arith.constant 9.99999974E-6 : f32
    %240 = vector.broadcast %cst_73 : f32 to vector<16x1xf32>
    %241 = arith.addf %237, %240 : vector<16x1xf32>
    %242 = math.rsqrt %241 : vector<16x1xf32>
    %243 = vector.broadcast %242 : vector<16x1xf32> to vector<16x32xf32>
    %244 = arith.mulf %239, %243 : vector<16x32xf32>
    %245 = vector.broadcast %148 : vector<1x32xf32> to vector<16x32xf32>
    %246 = arith.mulf %244, %245 : vector<16x32xf32>
    %247 = vector.broadcast %149 : vector<1x32xf32> to vector<16x32xf32>
    %248 = arith.addf %246, %247 : vector<16x32xf32>
    %c128 = arith.constant 128 : index
    %c0_74 = arith.constant 0 : index
    %249 = vector.load %arg1[%c128, %c0_74] : memref<160x128xbf16, #tpu.memory_space<vmem>>, vector<32x128xbf16>
    %250 = arith.truncf %248 : vector<16x32xf32> to vector<16x32xbf16>
    %cst_75 = arith.constant dense<0.000000e+00> : vector<16x128xf32>
    %251 = tpu.matmul %250, %249, %cst_75 {dimension_numbers = #tpu.dot_dimension_numbers<[1], [0], [0], [1], [0, 0, 1, 1], [], []>} : vector<16x32xbf16>, vector<32x128xbf16>, vector<16x128xf32> -> vector<16x128xf32>
    %c16 = arith.constant 16 : index
    %c0_76 = arith.constant 0 : index
    %252 = vector.load %arg2[%c16, %c0_76] : memref<18x128xf32, #tpu.memory_space<vmem>>, vector<1x128xf32>
    %253 = vector.broadcast %252 : vector<1x128xf32> to vector<16x128xf32>
    %254 = arith.addf %251, %253 : vector<16x128xf32>
    %c0_77 = arith.constant 0 : index
    %c0_78 = arith.constant 0 : index
    %255 = vector.load %arg3[%c0_77, %c0_78] : memref<16x128xf32, #tpu.memory_space<vmem>>, vector<16x128xf32>
    tpu.vector_store %arg3[%c0_77, %c0_78], %254 {strides = array<i32>} : memref<16x128xf32, #tpu.memory_space<vmem>>, vector<16x128xf32>,
    return
  }
}

</mosaic_0001>

<llo_original>
// kernel: forward.1
$region0: #{forward.1}
  #allocation0 [shape = 'u32[]', space=smem, size = 0x4, offset = 0x4, fixed_abs, tag = 'smem constant byte address 0x4 - core index']
  #allocation1 [shape = 'u32[144,128]{1,0:T(1,128)}', space=vmem, size = 0x12000, scoped, tag = 'internal scratch']
  %s0 = inlined_call_operand.vmem [shape: f32[16,32], index: 0, kind: input, shape index: {}]
  %s1 = inlined_call_operand.vmem [shape: bf16[160,128], index: 1, kind: input, shape index: {}]
  %s2 = inlined_call_operand.vmem [shape: f32[18,128], index: 2, kind: input, shape index: {}]
  %s3 = inlined_call_operand.vmem [shape: f32[16,128], index: 3, kind: output, shape index: {}]
  %s4 = sld [smem:[#allocation0]]
  $region22: #{forward.1} parent=0
    _
  %s6 = ssub.s32 1, %s4
  %s7 = scalar_select 0, %s6, %s4
  // Predicated region
  $region2: #{forward.1} parent=0 // pred_check
    _
  $region3: #{forward.1} parent=0 // pred_check_branch
    %9 = sbr.rel (0) target = $region5
  $region4: #{forward.1} parent=0 // pred_region
    _
  $region5: #{forward.1} parent=0 // pred_fallthru
    _
  // Predicated region
  $region6: #{forward.1} parent=0 // pred_check
    _
  $region7: #{forward.1} parent=0 // pred_check_branch
    %11 = sbr.rel (0) target = $region9
  $region8: #{forward.1} parent=0 // pred_region
    _
  $region9: #{forward.1} parent=0 // pred_fallthru
    _
  // Predicated region
  $region10: #{forward.1} parent=0 // pred_check
    _
  $region11: #{forward.1} parent=0 // pred_check_branch
    %13 = sbr.rel (0) target = $region13
  $region12: #{forward.1} parent=0 // pred_region
    _
  $region13: #{forward.1} parent=0 // pred_fallthru
    _
  %v15 = vld [vmem:[%s0] sm:$0xff]
  %v16 = vld [vmem:[%s0 + $0x8] sm:$0xff]
  %v17 = vlaneseq
  %v18 = vshrl.u32 %v17, 7
  %v19 = vadd.s32 %v18, 8
  %v20 = vadd.s32 %v18, 16
  %v21 = vadd.s32 %v18, 24
  %v22 = vadd.s32 %v18, 32
  %v23 = vadd.s32 %v18, 40
  %v24 = vadd.s32 %v18, 48
  %v25 = vadd.s32 %v18, 56
  %v26 = vlaneseq
  %v27 = vand.u32 %v26, 127
  %v28 = vand.u32 %v18, 15
  %v29 = vand.u32 %v19, 15
  %v30 = vand.u32 %v20, 15
  %v31 = vand.u32 %v21, 15
  %v32 = vand.u32 %v22, 15
  %v33 = vand.u32 %v23, 15
  %v34 = vand.u32 %v24, 15
  %v35 = vand.u32 %v25, 15
  %v36 = vshra.s32 %v28, 3
  %v37 = vshra.s32 %v29, 3
  %v38 = vshra.s32 %v30, 3
  %v39 = vshra.s32 %v31, 3
  %v40 = vshra.s32 %v32, 3
  %v41 = vshra.s32 %v33, 3
  %v42 = vshra.s32 %v34, 3
  %v43 = vshra.s32 %v35, 3
  %v44 = vshra.s32 %v27, 3
  %vm45 = vcmp.eq.s32.totalorder %v36, %v44
  %vm46 = vcmp.eq.s32.totalorder %v37, %v44
  %vm47 = vcmp.eq.s32.totalorder %v38, %v44
  %vm48 = vcmp.eq.s32.totalorder %v39, %v44
  %vm49 = vcmp.eq.s32.totalorder %v40, %v44
  %vm50 = vcmp.eq.s32.totalorder %v41, %v44
  %vm51 = vcmp.eq.s32.totalorder %v42, %v44
  %vm52 = vcmp.eq.s32.totalorder %v43, %v44
  %v53 = vand.u32 %v27, 7
  %v54 = vand.u32 %v28, 7
  %v55 = vand.u32 %v29, 7
  %v56 = vand.u32 %v30, 7
  %v57 = vand.u32 %v31, 7
  %v58 = vand.u32 %v32, 7
  %v59 = vand.u32 %v33, 7
  %v60 = vand.u32 %v34, 7
  %v61 = vand.u32 %v35, 7
  %vm62 = vcmp.le.s32.totalorder %v53, %v54
  %vm63 = vcmp.le.s32.totalorder %v53, %v55
  %vm64 = vcmp.le.s32.totalorder %v53, %v56
  %vm65 = vcmp.le.s32.totalorder %v53, %v57
  %vm66 = vcmp.le.s32.totalorder %v53, %v58
  %vm67 = vcmp.le.s32.totalorder %v53, %v59
  %vm68 = vcmp.le.s32.totalorder %v53, %v60
  %vm69 = vcmp.le.s32.totalorder %v53, %v61
  %vm70 = vmand %vm45, %vm62
  %vm71 = vmand %vm46, %vm63
  %vm72 = vmand %vm47, %vm64
  %vm73 = vmand %vm48, %vm65
  %vm74 = vmand %vm49, %vm66
  %vm75 = vmand %vm50, %vm67
  %vm76 = vmand %vm51, %vm68
  %vm77 = vmand %vm52, %vm69
  %v78 = vld [vmem:[%s2 + $0x11] sm:$0x1]
  %v79 = vsel %vm70, 0.0, -1e+09
  %v80 = vsel %vm71, 0.0, -1e+09
  %v81 = vsel %vm72, 0.0, -1e+09
  %v82 = vsel %vm73, 0.0, -1e+09
  %v83 = vsel %vm74, 0.0, -1e+09
  %v84 = vsel %vm75, 0.0, -1e+09
  %v85 = vsel %vm76, 0.0, -1e+09
  %v86 = vsel %vm77, 0.0, -1e+09
  %v87 = vlaneseq
  %v88 = vshrl.u32 %v87, 7
  %v89 = vsub.s32 0, %v88
  %v90 = vrot.slane %v78, %v89
  %v91 = vadd.f32 %v79, %v90
  %v92 = vadd.f32 %v80, %v90
  %v93 = vadd.f32 %v81, %v90
  %v94 = vadd.f32 %v82, %v90
  %v95 = vadd.f32 %v83, %v90
  %v96 = vadd.f32 %v84, %v90
  %v97 = vadd.f32 %v85, %v90
  %v98 = vadd.f32 %v86, %v90
  %v99 = vshra.s32 %v18, 4
  %v100 = vshra.s32 %v19, 4
  %v101 = vshra.s32 %v20, 4
  %v102 = vshra.s32 %v21, 4
  %v103 = vshra.s32 %v22, 4
  %v104 = vshra.s32 %v23, 4
  %v105 = vshra.s32 %v24, 4
  %v106 = vshra.s32 %v25, 4
  %vm107 = vcmp.eq.s32.totalorder %v99, %v44
  %vm108 = vcmp.eq.s32.totalorder %v100, %v44
  %vm109 = vcmp.eq.s32.totalorder %v101, %v44
  %vm110 = vcmp.eq.s32.totalorder %v102, %v44
  %vm111 = vcmp.eq.s32.totalorder %v103, %v44
  %vm112 = vcmp.eq.s32.totalorder %v104, %v44
  %vm113 = vcmp.eq.s32.totalorder %v105, %v44
  %vm114 = vcmp.eq.s32.totalorder %v106, %v44
  %v115 = vsel %vm107, 1, 0
  %v116 = vsel %vm108, 1, 0
  %v117 = vsel %vm109, 1, 0
  %v118 = vsel %vm110, 1, 0
  %v119 = vsel %vm111, 1, 0
  %v120 = vsel %vm112, 1, 0
  %v121 = vsel %vm113, 1, 0
  %v122 = vsel %vm114, 1, 0
  %v123 = vcvt.s32.f32 %v115
  %v124 = vcvt.s32.f32 %v116
  %v125 = vcvt.s32.f32 %v117
  %v126 = vcvt.s32.f32 %v118
  %v127 = vcvt.s32.f32 %v119
  %v128 = vcvt.s32.f32 %v120
  %v129 = vcvt.s32.f32 %v121
  %v130 = vcvt.s32.f32 %v122
  %v131 = vld [vmem:[%s1] sm:$0xf]
  %v132 = vld [vmem:[%s1 + $0x4] sm:$0xf]
  %v133 = vld [vmem:[%s1 + $0x8] sm:$0xf]
  %v134 = vld [vmem:[%s1 + $0xc] sm:$0xf]
  %v135 = vld [vmem:[%s1 + $0x10] sm:$0xf]
  %v136 = vld [vmem:[%s1 + $0x14] sm:$0xf]
  %v137 = vld [vmem:[%s1 + $0x18] sm:$0xf]
  %v138 = vld [vmem:[%s1 + $0x1c] sm:$0xf]
  %v139 = vld [vmem:[%s2] sm:$0x1]
  %v140 = vld [vmem:[%s2 + $0x1] sm:$0x1]
  %v141 = vld [vmem:[%s2 + $0x2] sm:$0x1]
  %v142 = vld [vmem:[%s2 + $0x3] sm:$0x1]
  %v143 = vld [vmem:[%s2 + $0x4] sm:$0x1]
  %v144 = vld [vmem:[%s2 + $0x5] sm:$0x1]
  %v145 = vld [vmem:[%s2 + $0x6] sm:$0x1]
  %v146 = vld [vmem:[%s2 + $0x7] sm:$0x1]
  %v147 = vpack.c.bf16 %v16, %v15
  %v148 = vlaneseq
  %v149 = vshrl.u32 %v148, 7
  %v150 = vsub.s32 0, %v149
  %v151 = vrot.slane %v139, %v150
  %v156 = vunpack.c.l.b16 %v131
  %v157 = vunpack.c.l.b16 %v132
  %v158 = vunpack.c.l.b16 %v133
  %v159 = vunpack.c.l.b16 %v134
  %v160 = vpack.c.b16 %v157, %v156
  %v161 = vpack.c.b16 %v159, %v158
  %vm164 = vcmask 261120
  %v166 = vsel %vm164, %v147, 0
  %168 = vmatprep.subr.bf16.mxu0 0
  %169 = vmatpush1.bf16.msra.mxu0 %v160
  %170 = vmatprep.subr.bf16.mxu0 0
  %171 = vmatpush1.bf16.msra.mxu0 %v161
  %172 = vmatprep.subr.bf16.mxu0 0
  %173 = vmatpush1.bf16.msra.mxu0 0
  %174 = vmatprep.subr.bf16.mxu0 0
  %175 = vmatpush1.bf16.msra.mxu0 0
  %176 = vmatprep.subr.bf16.mxu0 0
  %177 = vmatpush1.bf16.msra.mxu0 0
  %178 = vmatprep.subr.bf16.mxu0 0
  %179 = vmatpush1.bf16.msra.mxu0 0
  %180 = vmatprep.subr.bf16.mxu0 0
  %181 = vmatpush1.bf16.msra.mxu0 0
  %182 = vmatprep.subr.bf16.mxu0 0
  %183 = vmatpush1.bf16.msra.mxu0 0
  %184 = vmatprep.subr.bf16.mxu0 0
  %185 = vmatpush1.bf16.msra.mxu0 0
  %186 = vmatprep.subr.bf16.mxu0 0
  %187 = vmatpush1.bf16.msra.mxu0 0
  %188 = vmatprep.subr.bf16.mxu0 0
  %189 = vmatpush1.bf16.msra.mxu0 0
  %190 = vmatprep.subr.bf16.mxu0 0
  %191 = vmatpush1.bf16.msra.mxu0 0
  %192 = vmatprep.subr.bf16.mxu0 0
  %193 = vmatpush1.bf16.msra.mxu0 0
  %194 = vmatprep.subr.bf16.mxu0 0
  %195 = vmatpush1.bf16.msra.mxu0 0
  %196 = vmatprep.subr.bf16.mxu0 0
  %197 = vmatpush1.bf16.msra.mxu0 0
  %198 = vmatprep.subr.bf16.mxu0 0
  %199 = vmatpush1.bf16.msra.mxu0 0
  %200 = vmatprep.mubr.bf16.mxu0 0
  %201 = vmatmul.mubr.bf16.gmra.mrb[0].mxu0 %v166
  %v202 = vpop.f32.mrb[0].mxu0
  %v203 = vadd.f32 %v151, %v202
  %v204 = vpop.f32.mrb[0].mxu0
  %v205 = vpop.f32.mrb[0].mxu0
  %v206 = vadd.f32 %v151, %v205
  %v207 = vpop.f32.mrb[0].mxu0
  %208 = vdwg.mxu0
  %v209 = vmul.f32 %v203, %v123
  %v210 = vmul.f32 %v206, %v124
  %v211 = vmul.f32 %v203, %v125
  %v212 = vmul.f32 %v206, %v126
  %v213 = vmul.f32 %v203, %v127
  %v214 = vmul.f32 %v206, %v128
  %v215 = vmul.f32 %v203, %v129
  %v216 = vmul.f32 %v206, %v130
  %v217 = vpack.c.bf16 %v210, %v209
  %v218 = vpack.c.bf16 %v212, %v211
  %v219 = vpack.c.bf16 %v214, %v213
  %v220 = vpack.c.bf16 %v216, %v215
  %v221 = vpack.c.bf16 %v206, %v203
  %223 = vrot.lane.b32.xlu0 %v221, 96
  %v224 = vpop.permute.xlu0 %223
  %v226 = vsel %vm164, %v217, 0
  %v229 = vsel %vm164, %v218, 0
  %v232 = vsel %vm164, %v219, 0
  %v235 = vsel %vm164, %v220, 0
  %v238 = vsel %vm164, %v224, 0
  %240 = vmatprep.subr.bf16.mxu0 0
  %241 = vmatpush1.bf16.xpose.msra.mxu0 %v238
  %242 = vmatprep.subr.bf16.mxu0 0
  %243 = vmatpush1.bf16.xpose.msra.mxu0 0
  %244 = vmatprep.subr.bf16.mxu0 0
  %245 = vmatpush1.bf16.xpose.msra.mxu0 0
  %246 = vmatprep.subr.bf16.mxu0 0
  %247 = vmatpush1.bf16.xpose.msra.mxu0 0
  %248 = vmatprep.subr.bf16.mxu0 0
  %249 = vmatpush1.bf16.xpose.msra.mxu0 0
  %250 = vmatprep.subr.bf16.mxu0 0
  %251 = vmatpush1.bf16.xpose.msra.mxu0 0
  %252 = vmatprep.subr.bf16.mxu0 0
  %253 = vmatpush1.bf16.xpose.msra.mxu0 0
  %254 = vmatprep.subr.bf16.mxu0 0
  %255 = vmatpush1.bf16.xpose.msra.mxu0 0
  %256 = vmatprep.subr.bf16.mxu0 0
  %257 = vmatpush1.bf16.xpose.msra.mxu0 0
  %258 = vmatprep.subr.bf16.mxu0 0
  %259 = vmatpush1.bf16.xpose.msra.mxu0 0
  %260 = vmatprep.subr.bf16.mxu0 0
  %261 = vmatpush1.bf16.xpose.msra.mxu0 0
  %262 = vmatprep.subr.bf16.mxu0 0
  %263 = vmatpush1.bf16.xpose.msra.mxu0 0
  %264 = vmatprep.subr.bf16.mxu0 0
  %265 = vmatpush1.bf16.xpose.msra.mxu0 0
  %266 = vmatprep.subr.bf16.mxu0 0
  %267 = vmatpush1.bf16.xpose.msra.mxu0 0
  %268 = vmatprep.subr.bf16.mxu0 0
  %269 = vmatpush1.bf16.xpose.msra.mxu0 0
  %270 = vmatprep.subr.bf16.mxu0 0
  %271 = vmatpush1.bf16.xpose.msra.mxu0 0
  %272 = vmatprep.mubr.bf16.mxu0 0
  %273 = vmatmul.mubr.bf16.gmra.mrb[0].mxu0 %v226
  %v274 = vpop.f32.mrb[0].mxu0
  %v275 = vadd.f32 %v91, %v274
  %v276 = vpop.f32.mrb[0].mxu0
  %v277 = vpop.f32.mrb[0].mxu0
  %v278 = vadd.f32 %v92, %v277
  %v279 = vpop.f32.mrb[0].mxu0
  %280 = vmatprep.mubr.bf16.mxu0 0
  %281 = vmatmul.mubr.bf16.gmra.mrb[0].mxu0 %v229
  %v282 = vpop.f32.mrb[0].mxu0
  %v283 = vadd.f32 %v93, %v282
  %v284 = vpop.f32.mrb[0].mxu0
  %v285 = vpop.f32.mrb[0].mxu0
  %v286 = vadd.f32 %v94, %v285
  %v287 = vpop.f32.mrb[0].mxu0
  %288 = vmatprep.mubr.bf16.mxu0 0
  %289 = vmatmul.mubr.bf16.gmra.mrb[0].mxu0 %v232
  %v290 = vpop.f32.mrb[0].mxu0
  %v291 = vadd.f32 %v95, %v290
  %v292 = vpop.f32.mrb[0].mxu0
  %v293 = vpop.f32.mrb[0].mxu0
  %v294 = vadd.f32 %v96, %v293
  %v295 = vpop.f32.mrb[0].mxu0
  %296 = vmatprep.mubr.bf16.mxu0 0
  %297 = vmatmul.mubr.bf16.gmra.mrb[0].mxu0 %v235
  %v298 = vpop.f32.mrb[0].mxu0
  %v299 = vadd.f32 %v97, %v298
  %v300 = vpop.f32.mrb[0].mxu0
  %v301 = vpop.f32.mrb[0].mxu0
  %v302 = vadd.f32 %v98, %v301
  %v303 = vpop.f32.mrb[0].mxu0
  %304 = vdwg.mxu0
  %vm305 = vcmask 130048
  %v306 = vsel %vm305, %v275, -inf
  %307 = vmax.xlane.f32.xlu0 %v306
  %v308 = vpop.xlane.xlu0 %307
  %v309 = vsel %vm305, %v278, -inf
  %310 = vmax.xlane.f32.xlu0 %v309
  %v311 = vpop.xlane.xlu0 %310
  %v312 = vsel %vm305, %v283, -inf
  %313 = vmax.xlane.f32.xlu0 %v312
  %v314 = vpop.xlane.xlu0 %313
  %v315 = vsel %vm305, %v286, -inf
  %316 = vmax.xlane.f32.xlu0 %v315
  %v317 = vpop.xlane.xlu0 %316
  %v318 = vsel %vm305, %v291, -inf
  %319 = vmax.xlane.f32.xlu0 %v318
  %v320 = vpop.xlane.xlu0 %319
  %v321 = vsel %vm305, %v294, -inf
  %322 = vmax.xlane.f32.xlu0 %v321
  %v323 = vpop.xlane.xlu0 %322
  %v324 = vsel %vm305, %v299, -inf
  %325 = vmax.xlane.f32.xlu0 %v324
  %v326 = vpop.xlane.xlu0 %325
  %v327 = vsel %vm305, %v302, -inf
  %328 = vmax.xlane.f32.xlu0 %v327
  %v329 = vpop.xlane.xlu0 %328
  %v330 = vsub.f32 %v275, %v308
  %v331 = vsub.f32 %v278, %v311
  %v332 = vsub.f32 %v283, %v314
  %v333 = vsub.f32 %v286, %v317
  %v334 = vsub.f32 %v291, %v320
  %v335 = vsub.f32 %v294, %v323
  %v336 = vsub.f32 %v299, %v326
  %v337 = vsub.f32 %v302, %v329
  %v338 = vmul.f32 %v330, 1.442695
  %v339 = vpow.pop %v338
  %v340 = vmul.f32 %v331, 1.442695
  %v341 = vpow.pop %v340
  %v342 = vmul.f32 %v332, 1.442695
  %v343 = vpow.pop %v342
  %v344 = vmul.f32 %v333, 1.442695
  %v345 = vpow.pop %v344
  %v346 = vmul.f32 %v334, 1.442695
  %v347 = vpow.pop %v346
  %v348 = vmul.f32 %v335, 1.442695
  %v349 = vpow.pop %v348
  %v350 = vmul.f32 %v336, 1.442695
  %v351 = vpow.pop %v350
  %v352 = vmul.f32 %v337, 1.442695
  %v353 = vpow.pop %v352
  %v354 = vsel %vm305, %v339, 0.0
  %355 = vadd.xlane.f32.xlu0 %v354
  %v356 = vpop.xlane.xlu0 %355
  %v357 = vsel %vm305, %v341, 0.0
  %358 = vadd.xlane.f32.xlu0 %v357
  %v359 = vpop.xlane.xlu0 %358
  %v360 = vsel %vm305, %v343, 0.0
  %361 = vadd.xlane.f32.xlu0 %v360
  %v362 = vpop.xlane.xlu0 %361
  %v363 = vsel %vm305, %v345, 0.0
  %364 = vadd.xlane.f32.xlu0 %v363
  %v365 = vpop.xlane.xlu0 %364
  %v366 = vsel %vm305, %v347, 0.0
  %367 = vadd.xlane.f32.xlu0 %v366
  %v368 = vpop.xlane.xlu0 %367
  %v369 = vsel %vm305, %v349, 0.0
  %370 = vadd.xlane.f32.xlu0 %v369
  %v371 = vpop.xlane.xlu0 %370
  %v372 = vsel %vm305, %v351, 0.0
  %373 = vadd.xlane.f32.xlu0 %v372
  %v374 = vpop.xlane.xlu0 %373
  %v375 = vsel %vm305, %v353, 0.0
  %376 = vadd.xlane.f32.xlu0 %v375
  %v377 = vpop.xlane.xlu0 %376
  %v378 = vrcp.pop %v356
  %v379 = vrcp.pop %v359
  %v380 = vrcp.pop %v362
  %v381 = vrcp.pop %v365
  %v382 = vrcp.pop %v368
  %v383 = vrcp.pop %v371
  %v384 = vrcp.pop %v374
  %v385 = vrcp.pop %v377
  %v386 = vmul.f32 %v339, %v378
  %v387 = vmul.f32 %v341, %v379
  %v388 = vmul.f32 %v343, %v380
  %v389 = vmul.f32 %v345, %v381
  %v390 = vmul.f32 %v347, %v382
  %v391 = vmul.f32 %v349, %v383
  %v392 = vmul.f32 %v351, %v384
  %v393 = vmul.f32 %v353, %v385
  %v394 = vpack.c.bf16 %v387, %v386
  %v395 = vpack.c.bf16 %v389, %v388
  %v396 = vpack.c.bf16 %v391, %v390
  %v397 = vpack.c.bf16 %v393, %v392
  %398 = vrot.lane.b32.xlu0 %v221, 64
  %v399 = vpop.permute.xlu0 %398
  %v402 = vsel %vm305, %v394, 0
  %v405 = vsel %vm305, %v395, 0
  %v408 = vsel %vm305, %v396, 0
  %v411 = vsel %vm305, %v397, 0
  %413 = vmatprep.subr.bf16.mxu0 0
  %414 = vmatpush1.bf16.msra.mxu0 %v399
  %415 = vmatprep.subr.bf16.mxu0 0
  %416 = vmatpush1.bf16.msra.mxu0 0
  %417 = vmatprep.subr.bf16.mxu0 0
  %418 = vmatpush1.bf16.msra.mxu0 0
  %419 = vmatprep.subr.bf16.mxu0 0
  %420 = vmatpush1.bf16.msra.mxu0 0
  %421 = vmatprep.subr.bf16.mxu0 0
  %422 = vmatpush1.bf16.msra.mxu0 0
  %423 = vmatprep.subr.bf16.mxu0 0
  %424 = vmatpush1.bf16.msra.mxu0 0
  %425 = vmatprep.subr.bf16.mxu0 0
  %426 = vmatpush1.bf16.msra.mxu0 0
  %427 = vmatprep.subr.bf16.mxu0 0
  %428 = vmatpush1.bf16.msra.mxu0 0
  %429 = vmatprep.subr.bf16.mxu0 0
  %430 = vmatpush1.bf16.msra.mxu0 0
  %431 = vmatprep.subr.bf16.mxu0 0
  %432 = vmatpush1.bf16.msra.mxu0 0
  %433 = vmatprep.subr.bf16.mxu0 0
  %434 = vmatpush1.bf16.msra.mxu0 0
  %435 = vmatprep.subr.bf16.mxu0 0
  %436 = vmatpush1.bf16.msra.mxu0 0
  %437 = vmatprep.subr.bf16.mxu0 0
  %438 = vmatpush1.bf16.msra.mxu0 0
  %439 = vmatprep.subr.bf16.mxu0 0
  %440 = vmatpush1.bf16.msra.mxu0 0
  %441 = vmatprep.subr.bf16.mxu0 0
  %442 = vmatpush1.bf16.msra.mxu0 0
  %443 = vmatprep.subr.bf16.mxu0 0
  %444 = vmatpush1.bf16.msra.mxu0 0
  %445 = vmatprep.mubr.bf16.mxu0 0
  %446 = vmatmul.mubr.bf16.gmra.mrb[0].mxu0 %v402
  %v447 = vpop.f32.mrb[0].mxu0
  %v448 = vadd.f32 0.0, %v447
  %v449 = vpop.f32.mrb[0].mxu0
  %v450 = vpop.f32.mrb[0].mxu0
  %v451 = vadd.f32 0.0, %v450
  %v452 = vpop.f32.mrb[0].mxu0
  %453 = vmatprep.mubr.bf16.mxu0 0
  %454 = vmatmul.mubr.bf16.gmra.mrb[0].mxu0 %v405
  %v455 = vpop.f32.mrb[0].mxu0
  %v456 = vadd.f32 0.0, %v455
  %v457 = vpop.f32.mrb[0].mxu0
  %v458 = vpop.f32.mrb[0].mxu0
  %v459 = vadd.f32 0.0, %v458
  %v460 = vpop.f32.mrb[0].mxu0
  %461 = vmatprep.mubr.bf16.mxu0 0
  %462 = vmatmul.mubr.bf16.gmra.mrb[0].mxu0 %v408
  %v463 = vpop.f32.mrb[0].mxu0
  %v464 = vadd.f32 0.0, %v463
  %v465 = vpop.f32.mrb[0].mxu0
  %v466 = vpop.f32.mrb[0].mxu0
  %v467 = vadd.f32 0.0, %v466
  %v468 = vpop.f32.mrb[0].mxu0
  %469 = vmatprep.mubr.bf16.mxu0 0
  %470 = vmatmul.mubr.bf16.gmra.mrb[0].mxu0 %v411
  %v471 = vpop.f32.mrb[0].mxu0
  %v472 = vadd.f32 0.0, %v471
  %v473 = vpop.f32.mrb[0].mxu0
  %v474 = vpop.f32.mrb[0].mxu0
  %v475 = vadd.f32 0.0, %v474
  %v476 = vpop.f32.mrb[0].mxu0
  %477 = vdwg.mxu0
  %v478 = vmul.f32 %v448, %v123
  %v479 = vmul.f32 %v451, %v124
  %v480 = vmul.f32 %v456, %v125
  %v481 = vmul.f32 %v459, %v126
  %v482 = vmul.f32 %v464, %v127
  %v483 = vmul.f32 %v467, %v128
  %v484 = vmul.f32 %v472, %v129
  %v485 = vmul.f32 %v475, %v130
  %v486 = vadd.f32 %v478, %v480
  %v487 = vadd.f32 %v479, %v481
  %v488 = vadd.f32 %v486, %v482
  %v489 = vadd.f32 %v487, %v483
  %v490 = vadd.f32 %v488, %v484
  %v491 = vadd.f32 %v489, %v485
  %v492 = vpack.c.bf16 %v491, %v490
  %v493 = vlaneseq
  %v494 = vshrl.u32 %v493, 7
  %v495 = vsub.s32 0, %v494
  %v496 = vrot.slane %v140, %v495
  %497 = vrot.lane.b32.xlu0 %v160, 32
  %v498 = vpop.permute.xlu0 %497
  %499 = vrot.lane.b32.xlu0 %v161, 32
  %v500 = vpop.permute.xlu0 %499
  %v504 = vsel %vm164, %v492, 0
  %506 = vmatprep.subr.bf16.mxu0 0
  %507 = vmatpush1.bf16.msra.mxu0 %v498
  %508 = vmatprep.subr.bf16.mxu0 0
  %509 = vmatpush1.bf16.msra.mxu0 %v500
  %510 = vmatprep.subr.bf16.mxu0 0
  %511 = vmatpush1.bf16.msra.mxu0 0
  %512 = vmatprep.subr.bf16.mxu0 0
  %513 = vmatpush1.bf16.msra.mxu0 0
  %514 = vmatprep.subr.bf16.mxu0 0
  %515 = vmatpush1.bf16.msra.mxu0 0
  %516 = vmatprep.subr.bf16.mxu0 0
  %517 = vmatpush1.bf16.msra.mxu0 0
  %518 = vmatprep.subr.bf16.mxu0 0
  %519 = vmatpush1.bf16.msra.mxu0 0
  %520 = vmatprep.subr.bf16.mxu0 0
  %521 = vmatpush1.bf16.msra.mxu0 0
  %522 = vmatprep.subr.bf16.mxu0 0
  %523 = vmatpush1.bf16.msra.mxu0 0
  %524 = vmatprep.subr.bf16.mxu0 0
  %525 = vmatpush1.bf16.msra.mxu0 0
  %526 = vmatprep.subr.bf16.mxu0 0
  %527 = vmatpush1.bf16.msra.mxu0 0
  %528 = vmatprep.subr.bf16.mxu0 0
  %529 = vmatpush1.bf16.msra.mxu0 0
  %530 = vmatprep.subr.bf16.mxu0 0
  %531 = vmatpush1.bf16.msra.mxu0 0
  %532 = vmatprep.subr.bf16.mxu0 0
  %533 = vmatpush1.bf16.msra.mxu0 0
  %534 = vmatprep.subr.bf16.mxu0 0
  %535 = vmatpush1.bf16.msra.mxu0 0
  %536 = vmatprep.subr.bf16.mxu0 0
  %537 = vmatpush1.bf16.msra.mxu0 0
  %538 = vmatprep.mubr.bf16.mxu0 0
  %539 = vmatmul.mubr.bf16.gmra.mrb[0].mxu0 %v504
  %v540 = vpop.f32.mrb[0].mxu0
  %v541 = vadd.f32 %v496, %v540
  %v542 = vpop.f32.mrb[0].mxu0
  %v543 = vpop.f32.mrb[0].mxu0
  %v544 = vadd.f32 %v496, %v543
  %v545 = vpop.f32.mrb[0].mxu0
  %546 = vdwg.mxu0
  %v547 = vadd.f32 %v15, %v541
  %v548 = vadd.f32 %v16, %v544
  %v549 = vsel %vm164, %v547, 0.0
  %550 = vadd.xlane.f32.xlu0 %v549
  %v551 = vpop.xlane.xlu0 %550
  %v552 = vsel %vm164, %v548, 0.0
  %553 = vadd.xlane.f32.xlu0 %v552
  %v554 = vpop.xlane.xlu0 %553
  %v555 = vrcp.pop 32.0
  %v556 = vmul.f32 %v551, %v555
  %v557 = vmul.f32 %v554, %v555
  %v558 = vsub.f32 %v547, %v556
  %v559 = vsub.f32 %v548, %v557
  %v560 = vmul.f32 %v558, %v558
  %v561 = vmul.f32 %v559, %v559
  %v562 = vsel %vm164, %v560, 0.0
  %563 = vadd.xlane.f32.xlu0 %v562
  %v564 = vpop.xlane.xlu0 %563
  %v565 = vsel %vm164, %v561, 0.0
  %566 = vadd.xlane.f32.xlu0 %v565
  %v567 = vpop.xlane.xlu0 %566
  %v568 = vmul.f32 %v564, %v555
  %v569 = vmul.f32 %v567, %v555
  %v570 = vadd.f32 %v568, 1e-05
  %v571 = vadd.f32 %v569, 1e-05
  %v572 = vrsqrt.pop %v570
  %v573 = vrsqrt.pop %v571
  %v574 = vmul.f32 %v558, %v572
  %v575 = vmul.f32 %v559, %v573
  %v576 = vlaneseq
  %v577 = vshrl.u32 %v576, 7
  %v578 = vsub.s32 0, %v577
  %v579 = vrot.slane %v141, %v578
  %v580 = vmul.f32 %v574, %v579
  %v581 = vmul.f32 %v575, %v579
  %v582 = vlaneseq
  %v583 = vshrl.u32 %v582, 7
  %v584 = vsub.s32 0, %v583
  %v585 = vrot.slane %v142, %v584
  %v586 = vadd.f32 %v580, %v585
  %v587 = vadd.f32 %v581, %v585
  %v588 = vpack.c.bf16 %v587, %v586
  %v589 = vlaneseq
  %v590 = vshrl.u32 %v589, 7
  %v591 = vsub.s32 0, %v590
  %v592 = vrot.slane %v145, %v591
  %v597 = vunpack.c.l.b16 %v135
  %v598 = vunpack.c.l.b16 %v136
  %v599 = vunpack.c.l.b16 %v137
  %v600 = vunpack.c.l.b16 %v138
  %v601 = vpack.c.b16 %v598, %v597
  %v602 = vpack.c.b16 %v600, %v599
  %v606 = vsel %vm164, %v588, 0
  %608 = vmatprep.subr.bf16.mxu0 0
  %609 = vmatpush1.bf16.msra.mxu0 %v601
  %610 = vmatprep.subr.bf16.mxu0 0
  %611 = vmatpush1.bf16.msra.mxu0 %v602
  %612 = vmatprep.subr.bf16.mxu0 0
  %613 = vmatpush1.bf16.msra.mxu0 0
  %614 = vmatprep.subr.bf16.mxu0 0
  %615 = vmatpush1.bf16.msra.mxu0 0
  %616 = vmatprep.subr.bf16.mxu0 0
  %617 = vmatpush1.bf16.msra.mxu0 0
  %618 = vmatprep.subr.bf16.mxu0 0
  %619 = vmatpush1.bf16.msra.mxu0 0
  %620 = vmatprep.subr.bf16.mxu0 0
  %621 = vmatpush1.bf16.msra.mxu0 0
  %622 = vmatprep.subr.bf16.mxu0 0
  %623 = vmatpush1.bf16.msra.mxu0 0
  %624 = vmatprep.subr.bf16.mxu0 0
  %625 = vmatpush1.bf16.msra.mxu0 0
  %626 = vmatprep.subr.bf16.mxu0 0
  %627 = vmatpush1.bf16.msra.mxu0 0
  %628 = vmatprep.subr.bf16.mxu0 0
  %629 = vmatpush1.bf16.msra.mxu0 0
  %630 = vmatprep.subr.bf16.mxu0 0
  %631 = vmatpush1.bf16.msra.mxu0 0
  %632 = vmatprep.subr.bf16.mxu0 0
  %633 = vmatpush1.bf16.msra.mxu0 0
  %634 = vmatprep.subr.bf16.mxu0 0
  %635 = vmatpush1.bf16.msra.mxu0 0
  %636 = vmatprep.subr.bf16.mxu0 0
  %637 = vmatpush1.bf16.msra.mxu0 0
  %638 = vmatprep.subr.bf16.mxu0 0
  %639 = vmatpush1.bf16.msra.mxu0 0
  %640 = vmatprep.mubr.bf16.mxu0 0
  %641 = vmatmul.mubr.bf16.gmra.mrb[0].mxu0 %v606
  %v642 = vpop.f32.mrb[0].mxu0
  %v643 = vadd.f32 %v592, %v642
  %v644 = vpop.f32.mrb[0].mxu0
  %v645 = vpop.f32.mrb[0].mxu0
  %v646 = vadd.f32 %v592, %v645
  %v647 = vpop.f32.mrb[0].mxu0
  %648 = vdwg.mxu0
  %v649 = vmax.f32 %v643, 0.0
  %v650 = vmax.f32 %v646, 0.0
  %v651 = vpack.c.bf16 %v650, %v649
  %v652 = vlaneseq
  %v653 = vshrl.u32 %v652, 7
  %v654 = vsub.s32 0, %v653
  %v655 = vrot.slane %v146, %v654
  %656 = vrot.lane.b32.xlu0 %v601, 64
  %v657 = vpop.permute.xlu0 %656
  %658 = vrot.lane.b32.xlu0 %v602, 64
  %v659 = vpop.permute.xlu0 %658
  %vm660 = vcmask 523264
  %v662 = vsel %vm660, %v651, 0
  %v665 = vsel %vm660, %v657, 0
  %v668 = vsel %vm660, %v659, 0
  %670 = vmatprep.subr.bf16.mxu0 0
  %671 = vmatpush1.bf16.xpose.msra.mxu0 %v665
  %672 = vmatprep.subr.bf16.mxu0 0
  %673 = vmatpush1.bf16.xpose.msra.mxu0 %v668
  %674 = vmatprep.subr.bf16.mxu0 0
  %675 = vmatpush1.bf16.xpose.msra.mxu0 0
  %676 = vmatprep.subr.bf16.mxu0 0
  %677 = vmatpush1.bf16.xpose.msra.mxu0 0
  %678 = vmatprep.subr.bf16.mxu0 0
  %679 = vmatpush1.bf16.xpose.msra.mxu0 0
  %680 = vmatprep.subr.bf16.mxu0 0
  %681 = vmatpush1.bf16.xpose.msra.mxu0 0
  %682 = vmatprep.subr.bf16.mxu0 0
  %683 = vmatpush1.bf16.xpose.msra.mxu0 0
  %684 = vmatprep.subr.bf16.mxu0 0
  %685 = vmatpush1.bf16.xpose.msra.mxu0 0
  %686 = vmatprep.subr.bf16.mxu0 0
  %687 = vmatpush1.bf16.xpose.msra.mxu0 0
  %688 = vmatprep.subr.bf16.mxu0 0
  %689 = vmatpush1.bf16.xpose.msra.mxu0 0
  %690 = vmatprep.subr.bf16.mxu0 0
  %691 = vmatpush1.bf16.xpose.msra.mxu0 0
  %692 = vmatprep.subr.bf16.mxu0 0
  %693 = vmatpush1.bf16.xpose.msra.mxu0 0
  %694 = vmatprep.subr.bf16.mxu0 0
  %695 = vmatpush1.bf16.xpose.msra.mxu0 0
  %696 = vmatprep.subr.bf16.mxu0 0
  %697 = vmatpush1.bf16.xpose.msra.mxu0 0
  %698 = vmatprep.subr.bf16.mxu0 0
  %699 = vmatpush1.bf16.xpose.msra.mxu0 0
  %700 = vmatprep.subr.bf16.mxu0 0
  %701 = vmatpush1.bf16.xpose.msra.mxu0 0
  %702 = vmatprep.mubr.bf16.mxu0 0
  %703 = vmatmul.mubr.bf16.gmra.mrb[0].mxu0 %v662
  %v704 = vpop.f32.mrb[0].mxu0
  %v705 = vadd.f32 %v655, %v704
  %v706 = vpop.f32.mrb[0].mxu0
  %v707 = vpop.f32.mrb[0].mxu0
  %v708 = vadd.f32 %v655, %v707
  %v709 = vpop.f32.mrb[0].mxu0
  %710 = vdwg.mxu0
  %v711 = vadd.f32 %v586, %v705
  %v712 = vadd.f32 %v587, %v708
  %v713 = vsel %vm164, %v711, 0.0
  %714 = vadd.xlane.f32.xlu0 %v713
  %v715 = vpop.xlane.xlu0 %714
  %v716 = vsel %vm164, %v712, 0.0
  %717 = vadd.xlane.f32.xlu0 %v716
  %v718 = vpop.xlane.xlu0 %717
  %v719 = vmul.f32 %v715, %v555
  %v720 = vmul.f32 %v718, %v555
  %v721 = vsub.f32 %v711, %v719
  %v722 = vsub.f32 %v712, %v720
  %v723 = vmul.f32 %v721, %v721
  %v724 = vmul.f32 %v722, %v722
  %v725 = vsel %vm164, %v723, 0.0
  %726 = vadd.xlane.f32.xlu0 %v725
  %v727 = vpop.xlane.xlu0 %726
  %v728 = vsel %vm164, %v724, 0.0
  %729 = vadd.xlane.f32.xlu0 %v728
  %v730 = vpop.xlane.xlu0 %729
  %v731 = vmul.f32 %v727, %v555
  %v732 = vmul.f32 %v730, %v555
  %v733 = vadd.f32 %v731, 1e-05
  %v734 = vadd.f32 %v732, 1e-05
  %v735 = vrsqrt.pop %v733
  %v736 = vrsqrt.pop %v734
  %v737 = vmul.f32 %v721, %v735
  %v738 = vmul.f32 %v722, %v736
  %v739 = vlaneseq
  %v740 = vshrl.u32 %v739, 7
  %v741 = vsub.s32 0, %v740
  %v742 = vrot.slane %v143, %v741
  %v743 = vmul.f32 %v737, %v742
  %v744 = vmul.f32 %v738, %v742
  %v745 = vlaneseq
  %v746 = vshrl.u32 %v745, 7
  %v747 = vsub.s32 0, %v746
  %v748 = vrot.slane %v144, %v747
  %v749 = vadd.f32 %v743, %v748
  %v750 = vadd.f32 %v744, %v748
  %v751 = vld [vmem:[%s1 + $0x20] sm:$0xf]
  %v752 = vld [vmem:[%s1 + $0x24] sm:$0xf]
  %v753 = vld [vmem:[%s1 + $0x28] sm:$0xf]
  %v754 = vld [vmem:[%s1 + $0x2c] sm:$0xf]
  %v755 = vld [vmem:[%s1 + $0x30] sm:$0xf]
  %v756 = vld [vmem:[%s1 + $0x34] sm:$0xf]
  %v757 = vld [vmem:[%s1 + $0x38] sm:$0xf]
  %v758 = vld [vmem:[%s1 + $0x3c] sm:$0xf]
  %v759 = vld [vmem:[%s2 + $0x8] sm:$0x1]
  %v760 = vld [vmem:[%s2 + $0x9] sm:$0x1]
  %v761 = vld [vmem:[%s2 + $0xa] sm:$0x1]
  %v762 = vld [vmem:[%s2 + $0xb] sm:$0x1]
  %v763 = vld [vmem:[%s2 + $0xc] sm:$0x1]
  %v764 = vld [vmem:[%s2 + $0xd] sm:$0x1]
  %v765 = vld [vmem:[%s2 + $0xe] sm:$0x1]
  %v766 = vld [vmem:[%s2 + $0xf] sm:$0x1]
  %v767 = vpack.c.bf16 %v750, %v749
  %v768 = vlaneseq
  %v769 = vshrl.u32 %v768, 7
  %v770 = vsub.s32 0, %v769
  %v771 = vrot.slane %v759, %v770
  %v776 = vunpack.c.l.b16 %v751
  %v777 = vunpack.c.l.b16 %v752
  %v778 = vunpack.c.l.b16 %v753
  %v779 = vunpack.c.l.b16 %v754
  %v780 = vpack.c.b16 %v777, %v776
  %v781 = vpack.c.b16 %v779, %v778
  %v785 = vsel %vm164, %v767, 0
  %787 = vmatprep.subr.bf16.mxu0 0
  %788 = vmatpush1.bf16.msra.mxu0 %v780
  %789 = vmatprep.subr.bf16.mxu0 0
  %790 = vmatpush1.bf16.msra.mxu0 %v781
  %791 = vmatprep.subr.bf16.mxu0 0
  %792 = vmatpush1.bf16.msra.mxu0 0
  %793 = vmatprep.subr.bf16.mxu0 0
  %794 = vmatpush1.bf16.msra.mxu0 0
  %795 = vmatprep.subr.bf16.mxu0 0
  %796 = vmatpush1.bf16.msra.mxu0 0
  %797 = vmatprep.subr.bf16.mxu0 0
  %798 = vmatpush1.bf16.msra.mxu0 0
  %799 = vmatprep.subr.bf16.mxu0 0
  %800 = vmatpush1.bf16.msra.mxu0 0
  %801 = vmatprep.subr.bf16.mxu0 0
  %802 = vmatpush1.bf16.msra.mxu0 0
  %803 = vmatprep.subr.bf16.mxu0 0
  %804 = vmatpush1.bf16.msra.mxu0 0
  %805 = vmatprep.subr.bf16.mxu0 0
  %806 = vmatpush1.bf16.msra.mxu0 0
  %807 = vmatprep.subr.bf16.mxu0 0
  %808 = vmatpush1.bf16.msra.mxu0 0
  %809 = vmatprep.subr.bf16.mxu0 0
  %810 = vmatpush1.bf16.msra.mxu0 0
  %811 = vmatprep.subr.bf16.mxu0 0
  %812 = vmatpush1.bf16.msra.mxu0 0
  %813 = vmatprep.subr.bf16.mxu0 0
  %814 = vmatpush1.bf16.msra.mxu0 0
  %815 = vmatprep.subr.bf16.mxu0 0
  %816 = vmatpush1.bf16.msra.mxu0 0
  %817 = vmatprep.subr.bf16.mxu0 0
  %818 = vmatpush1.bf16.msra.mxu0 0
  %819 = vmatprep.mubr.bf16.mxu0 0
  %820 = vmatmul.mubr.bf16.gmra.mrb[0].mxu0 %v785
  %v821 = vpop.f32.mrb[0].mxu0
  %v822 = vadd.f32 %v771, %v821
  %v823 = vpop.f32.mrb[0].mxu0
  %v824 = vpop.f32.mrb[0].mxu0
  %v825 = vadd.f32 %v771, %v824
  %v826 = vpop.f32.mrb[0].mxu0
  %827 = vdwg.mxu0
  %v828 = vmul.f32 %v822, %v123
  %v829 = vmul.f32 %v825, %v124
  %v830 = vmul.f32 %v822, %v125
  %v831 = vmul.f32 %v825, %v126
  %v832 = vmul.f32 %v822, %v127
  %v833 = vmul.f32 %v825, %v128
  %v834 = vmul.f32 %v822, %v129
  %v835 = vmul.f32 %v825, %v130
  %v836 = vpack.c.bf16 %v829, %v828
  %v837 = vpack.c.bf16 %v831, %v830
  %v838 = vpack.c.bf16 %v833, %v832
  %v839 = vpack.c.bf16 %v835, %v834
  %v840 = vpack.c.bf16 %v825, %v822
  %842 = vrot.lane.b32.xlu0 %v840, 96
  %v843 = vpop.permute.xlu0 %842
  %v845 = vsel %vm164, %v836, 0
  %v848 = vsel %vm164, %v837, 0
  %v851 = vsel %vm164, %v838, 0
  %v854 = vsel %vm164, %v839, 0
  %v857 = vsel %vm164, %v843, 0
  %859 = vmatprep.subr.bf16.mxu0 0
  %860 = vmatpush1.bf16.xpose.msra.mxu0 %v857
  %861 = vmatprep.subr.bf16.mxu0 0
  %862 = vmatpush1.bf16.xpose.msra.mxu0 0
  %863 = vmatprep.subr.bf16.mxu0 0
  %864 = vmatpush1.bf16.xpose.msra.mxu0 0
  %865 = vmatprep.subr.bf16.mxu0 0
  %866 = vmatpush1.bf16.xpose.msra.mxu0 0
  %867 = vmatprep.subr.bf16.mxu0 0
  %868 = vmatpush1.bf16.xpose.msra.mxu0 0
  %869 = vmatprep.subr.bf16.mxu0 0
  %870 = vmatpush1.bf16.xpose.msra.mxu0 0
  %871 = vmatprep.subr.bf16.mxu0 0
  %872 = vmatpush1.bf16.xpose.msra.mxu0 0
  %873 = vmatprep.subr.bf16.mxu0 0
  %874 = vmatpush1.bf16.xpose.msra.mxu0 0
  %875 = vmatprep.subr.bf16.mxu0 0
  %876 = vmatpush1.bf16.xpose.msra.mxu0 0
  %877 = vmatprep.subr.bf16.mxu0 0
  %878 = vmatpush1.bf16.xpose.msra.mxu0 0
  %879 = vmatprep.subr.bf16.mxu0 0
  %880 = vmatpush1.bf16.xpose.msra.mxu0 0
  %881 = vmatprep.subr.bf16.mxu0 0
  %882 = vmatpush1.bf16.xpose.msra.mxu0 0
  %883 = vmatprep.subr.bf16.mxu0 0
  %884 = vmatpush1.bf16.xpose.msra.mxu0 0
  %885 = vmatprep.subr.bf16.mxu0 0
  %886 = vmatpush1.bf16.xpose.msra.mxu0 0
  %887 = vmatprep.subr.bf16.mxu0 0
  %888 = vmatpush1.bf16.xpose.msra.mxu0 0
  %889 = vmatprep.subr.bf16.mxu0 0
  %890 = vmatpush1.bf16.xpose.msra.mxu0 0
  %891 = vmatprep.mubr.bf16.mxu0 0
  %892 = vmatmul.mubr.bf16.gmra.mrb[0].mxu0 %v845
  %v893 = vpop.f32.mrb[0].mxu0
  %v894 = vadd.f32 %v91, %v893
  %v895 = vpop.f32.mrb[0].mxu0
  %v896 = vpop.f32.mrb[0].mxu0
  %v897 = vadd.f32 %v92, %v896
  %v898 = vpop.f32.mrb[0].mxu0
  %899 = vmatprep.mubr.bf16.mxu0 0
  %900 = vmatmul.mubr.bf16.gmra.mrb[0].mxu0 %v848
  %v901 = vpop.f32.mrb[0].mxu0
  %v902 = vadd.f32 %v93, %v901
  %v903 = vpop.f32.mrb[0].mxu0
  %v904 = vpop.f32.mrb[0].mxu0
  %v905 = vadd.f32 %v94, %v904
  %v906 = vpop.f32.mrb[0].mxu0
  %907 = vmatprep.mubr.bf16.mxu0 0
  %908 = vmatmul.mubr.bf16.gmra.mrb[0].mxu0 %v851
  %v909 = vpop.f32.mrb[0].mxu0
  %v910 = vadd.f32 %v95, %v909
  %v911 = vpop.f32.mrb[0].mxu0
  %v912 = vpop.f32.mrb[0].mxu0
  %v913 = vadd.f32 %v96, %v912
  %v914 = vpop.f32.mrb[0].mxu0
  %915 = vmatprep.mubr.bf16.mxu0 0
  %916 = vmatmul.mubr.bf16.gmra.mrb[0].mxu0 %v854
  %v917 = vpop.f32.mrb[0].mxu0
  %v918 = vadd.f32 %v97, %v917
  %v919 = vpop.f32.mrb[0].mxu0
  %v920 = vpop.f32.mrb[0].mxu0
  %v921 = vadd.f32 %v98, %v920
  %v922 = vpop.f32.mrb[0].mxu0
  %923 = vdwg.mxu0
  %v924 = vsel %vm305, %v894, -inf
  %925 = vmax.xlane.f32.xlu0 %v924
  %v926 = vpop.xlane.xlu0 %925
  %v927 = vsel %vm305, %v897, -inf
  %928 = vmax.xlane.f32.xlu0 %v927
  %v929 = vpop.xlane.xlu0 %928
  %v930 = vsel %vm305, %v902, -inf
  %931 = vmax.xlane.f32.xlu0 %v930
  %v932 = vpop.xlane.xlu0 %931
  %v933 = vsel %vm305, %v905, -inf
  %934 = vmax.xlane.f32.xlu0 %v933
  %v935 = vpop.xlane.xlu0 %934
  %v936 = vsel %vm305, %v910, -inf
  %937 = vmax.xlane.f32.xlu0 %v936
  %v938 = vpop.xlane.xlu0 %937
  %v939 = vsel %vm305, %v913, -inf
  %940 = vmax.xlane.f32.xlu0 %v939
  %v941 = vpop.xlane.xlu0 %940
  %v942 = vsel %vm305, %v918, -inf
  %943 = vmax.xlane.f32.xlu0 %v942
  %v944 = vpop.xlane.xlu0 %943
  %v945 = vsel %vm305, %v921, -inf
  %946 = vmax.xlane.f32.xlu0 %v945
  %v947 = vpop.xlane.xlu0 %946
  %v948 = vsub.f32 %v894, %v926
  %v949 = vsub.f32 %v897, %v929
  %v950 = vsub.f32 %v902, %v932
  %v951 = vsub.f32 %v905, %v935
  %v952 = vsub.f32 %v910, %v938
  %v953 = vsub.f32 %v913, %v941
  %v954 = vsub.f32 %v918, %v944
  %v955 = vsub.f32 %v921, %v947
  %v956 = vmul.f32 %v948, 1.442695
  %v957 = vpow.pop %v956
  %v958 = vmul.f32 %v949, 1.442695
  %v959 = vpow.pop %v958
  %v960 = vmul.f32 %v950, 1.442695
  %v961 = vpow.pop %v960
  %v962 = vmul.f32 %v951, 1.442695
  %v963 = vpow.pop %v962
  %v964 = vmul.f32 %v952, 1.442695
  %v965 = vpow.pop %v964
  %v966 = vmul.f32 %v953, 1.442695
  %v967 = vpow.pop %v966
  %v968 = vmul.f32 %v954, 1.442695
  %v969 = vpow.pop %v968
  %v970 = vmul.f32 %v955, 1.442695
  %v971 = vpow.pop %v970
  %v972 = vsel %vm305, %v957, 0.0
  %973 = vadd.xlane.f32.xlu0 %v972
  %v974 = vpop.xlane.xlu0 %973
  %v975 = vsel %vm305, %v959, 0.0
  %976 = vadd.xlane.f32.xlu0 %v975
  %v977 = vpop.xlane.xlu0 %976
  %v978 = vsel %vm305, %v961, 0.0
  %979 = vadd.xlane.f32.xlu0 %v978
  %v980 = vpop.xlane.xlu0 %979
  %v981 = vsel %vm305, %v963, 0.0
  %982 = vadd.xlane.f32.xlu0 %v981
  %v983 = vpop.xlane.xlu0 %982
  %v984 = vsel %vm305, %v965, 0.0
  %985 = vadd.xlane.f32.xlu0 %v984
  %v986 = vpop.xlane.xlu0 %985
  %v987 = vsel %vm305, %v967, 0.0
  %988 = vadd.xlane.f32.xlu0 %v987
  %v989 = vpop.xlane.xlu0 %988
  %v990 = vsel %vm305, %v969, 0.0
  %991 = vadd.xlane.f32.xlu0 %v990
  %v992 = vpop.xlane.xlu0 %991
  %v993 = vsel %vm305, %v971, 0.0
  %994 = vadd.xlane.f32.xlu0 %v993
  %v995 = vpop.xlane.xlu0 %994
  %v996 = vrcp.pop %v974
  %v997 = vrcp.pop %v977
  %v998 = vrcp.pop %v980
  %v999 = vrcp.pop %v983
  %v1000 = vrcp.pop %v986
  %v1001 = vrcp.pop %v989
  %v1002 = vrcp.pop %v992
  %v1003 = vrcp.pop %v995
  %v1004 = vmul.f32 %v957, %v996
  %v1005 = vmul.f32 %v959, %v997
  %v1006 = vmul.f32 %v961, %v998
  %v1007 = vmul.f32 %v963, %v999
  %v1008 = vmul.f32 %v965, %v1000
  %v1009 = vmul.f32 %v967, %v1001
  %v1010 = vmul.f32 %v969, %v1002
  %v1011 = vmul.f32 %v971, %v1003
  %v1012 = vpack.c.bf16 %v1005, %v1004
  %v1013 = vpack.c.bf16 %v1007, %v1006
  %v1014 = vpack.c.bf16 %v1009, %v1008
  %v1015 = vpack.c.bf16 %v1011, %v1010
  %1016 = vrot.lane.b32.xlu0 %v840, 64
  %v1017 = vpop.permute.xlu0 %1016
  %v1020 = vsel %vm305, %v1012, 0
  %v1023 = vsel %vm305, %v1013, 0
  %v1026 = vsel %vm305, %v1014, 0
  %v1029 = vsel %vm305, %v1015, 0
  %1031 = vmatprep.subr.bf16.mxu0 0
  %1032 = vmatpush1.bf16.msra.mxu0 %v1017
  %1033 = vmatprep.subr.bf16.mxu0 0
  %1034 = vmatpush1.bf16.msra.mxu0 0
  %1035 = vmatprep.subr.bf16.mxu0 0
  %1036 = vmatpush1.bf16.msra.mxu0 0
  %1037 = vmatprep.subr.bf16.mxu0 0
  %1038 = vmatpush1.bf16.msra.mxu0 0
  %1039 = vmatprep.subr.bf16.mxu0 0
  %1040 = vmatpush1.bf16.msra.mxu0 0
  %1041 = vmatprep.subr.bf16.mxu0 0
  %1042 = vmatpush1.bf16.msra.mxu0 0
  %1043 = vmatprep.subr.bf16.mxu0 0
  %1044 = vmatpush1.bf16.msra.mxu0 0
  %1045 = vmatprep.subr.bf16.mxu0 0
  %1046 = vmatpush1.bf16.msra.mxu0 0
  %1047 = vmatprep.subr.bf16.mxu0 0
  %1048 = vmatpush1.bf16.msra.mxu0 0
  %1049 = vmatprep.subr.bf16.mxu0 0
  %1050 = vmatpush1.bf16.msra.mxu0 0
  %1051 = vmatprep.subr.bf16.mxu0 0
  %1052 = vmatpush1.bf16.msra.mxu0 0
  %1053 = vmatprep.subr.bf16.mxu0 0
  %1054 = vmatpush1.bf16.msra.mxu0 0
  %1055 = vmatprep.subr.bf16.mxu0 0
  %1056 = vmatpush1.bf16.msra.mxu0 0
  %1057 = vmatprep.subr.bf16.mxu0 0
  %1058 = vmatpush1.bf16.msra.mxu0 0
  %1059 = vmatprep.subr.bf16.mxu0 0
  %1060 = vmatpush1.bf16.msra.mxu0 0
  %1061 = vmatprep.subr.bf16.mxu0 0
  %1062 = vmatpush1.bf16.msra.mxu0 0
  %1063 = vmatprep.mubr.bf16.mxu0 0
  %1064 = vmatmul.mubr.bf16.gmra.mrb[0].mxu0 %v1020
  %v1065 = vpop.f32.mrb[0].mxu0
  %v1066 = vadd.f32 0.0, %v1065
  %v1067 = vpop.f32.mrb[0].mxu0
  %v1068 = vpop.f32.mrb[0].mxu0
  %v1069 = vadd.f32 0.0, %v1068
  %v1070 = vpop.f32.mrb[0].mxu0
  %1071 = vmatprep.mubr.bf16.mxu0 0
  %1072 = vmatmul.mubr.bf16.gmra.mrb[0].mxu0 %v1023
  %v1073 = vpop.f32.mrb[0].mxu0
  %v1074 = vadd.f32 0.0, %v1073
  %v1075 = vpop.f32.mrb[0].mxu0
  %v1076 = vpop.f32.mrb[0].mxu0
  %v1077 = vadd.f32 0.0, %v1076
  %v1078 = vpop.f32.mrb[0].mxu0
  %1079 = vmatprep.mubr.bf16.mxu0 0
  %1080 = vmatmul.mubr.bf16.gmra.mrb[0].mxu0 %v1026
  %v1081 = vpop.f32.mrb[0].mxu0
  %v1082 = vadd.f32 0.0, %v1081
  %v1083 = vpop.f32.mrb[0].mxu0
  %v1084 = vpop.f32.mrb[0].mxu0
  %v1085 = vadd.f32 0.0, %v1084
  %v1086 = vpop.f32.mrb[0].mxu0
  %1087 = vmatprep.mubr.bf16.mxu0 0
  %1088 = vmatmul.mubr.bf16.gmra.mrb[0].mxu0 %v1029
  %v1089 = vpop.f32.mrb[0].mxu0
  %v1090 = vadd.f32 0.0, %v1089
  %v1091 = vpop.f32.mrb[0].mxu0
  %v1092 = vpop.f32.mrb[0].mxu0
  %v1093 = vadd.f32 0.0, %v1092
  %v1094 = vpop.f32.mrb[0].mxu0
  %1095 = vdwg.mxu0
  %v1096 = vmul.f32 %v1066, %v123
  %v1097 = vmul.f32 %v1069, %v124
  %v1098 = vmul.f32 %v1074, %v125
  %v1099 = vmul.f32 %v1077, %v126
  %v1100 = vmul.f32 %v1082, %v127
  %v1101 = vmul.f32 %v1085, %v128
  %v1102 = vmul.f32 %v1090, %v129
  %v1103 = vmul.f32 %v1093, %v130
  %v1104 = vadd.f32 %v1096, %v1098
  %v1105 = vadd.f32 %v1097, %v1099
  %v1106 = vadd.f32 %v1104, %v1100
  %v1107 = vadd.f32 %v1105, %v1101
  %v1108 = vadd.f32 %v1106, %v1102
  %v1109 = vadd.f32 %v1107, %v1103
  %v1110 = vpack.c.bf16 %v1109, %v1108
  %v1111 = vlaneseq
  %v1112 = vshrl.u32 %v1111, 7
  %v1113 = vsub.s32 0, %v1112
  %v1114 = vrot.slane %v760, %v1113
  %1115 = vrot.lane.b32.xlu0 %v780, 32
  %v1116 = vpop.permute.xlu0 %1115
  %1117 = vrot.lane.b32.xlu0 %v781, 32
  %v1118 = vpop.permute.xlu0 %1117
  %v1122 = vsel %vm164, %v1110, 0
  %1124 = vmatprep.subr.bf16.mxu0 0
  %1125 = vmatpush1.bf16.msra.mxu0 %v1116
  %1126 = vmatprep.subr.bf16.mxu0 0
  %1127 = vmatpush1.bf16.msra.mxu0 %v1118
  %1128 = vmatprep.subr.bf16.mxu0 0
  %1129 = vmatpush1.bf16.msra.mxu0 0
  %1130 = vmatprep.subr.bf16.mxu0 0
  %1131 = vmatpush1.bf16.msra.mxu0 0
  %1132 = vmatprep.subr.bf16.mxu0 0
  %1133 = vmatpush1.bf16.msra.mxu0 0
  %1134 = vmatprep.subr.bf16.mxu0 0
  %1135 = vmatpush1.bf16.msra.mxu0 0
  %1136 = vmatprep.subr.bf16.mxu0 0
  %1137 = vmatpush1.bf16.msra.mxu0 0
  %1138 = vmatprep.subr.bf16.mxu0 0
  %1139 = vmatpush1.bf16.msra.mxu0 0
  %1140 = vmatprep.subr.bf16.mxu0 0
  %1141 = vmatpush1.bf16.msra.mxu0 0
  %1142 = vmatprep.subr.bf16.mxu0 0
  %1143 = vmatpush1.bf16.msra.mxu0 0
  %1144 = vmatprep.subr.bf16.mxu0 0
  %1145 = vmatpush1.bf16.msra.mxu0 0
  %1146 = vmatprep.subr.bf16.mxu0 0
  %1147 = vmatpush1.bf16.msra.mxu0 0
  %1148 = vmatprep.subr.bf16.mxu0 0
  %1149 = vmatpush1.bf16.msra.mxu0 0
  %1150 = vmatprep.subr.bf16.mxu0 0
  %1151 = vmatpush1.bf16.msra.mxu0 0
  %1152 = vmatprep.subr.bf16.mxu0 0
  %1153 = vmatpush1.bf16.msra.mxu0 0
  %1154 = vmatprep.subr.bf16.mxu0 0
  %1155 = vmatpush1.bf16.msra.mxu0 0
  %1156 = vmatprep.mubr.bf16.mxu0 0
  %1157 = vmatmul.mubr.bf16.gmra.mrb[0].mxu0 %v1122
  %v1158 = vpop.f32.mrb[0].mxu0
  %v1159 = vadd.f32 %v1114, %v1158
  %v1160 = vpop.f32.mrb[0].mxu0
  %v1161 = vpop.f32.mrb[0].mxu0
  %v1162 = vadd.f32 %v1114, %v1161
  %v1163 = vpop.f32.mrb[0].mxu0
  %1164 = vdwg.mxu0
  %v1165 = vadd.f32 %v749, %v1159
  %v1166 = vadd.f32 %v750, %v1162
  %v1167 = vsel %vm164, %v1165, 0.0
  %1168 = vadd.xlane.f32.xlu0 %v1167
  %v1169 = vpop.xlane.xlu0 %1168
  %v1170 = vsel %vm164, %v1166, 0.0
  %1171 = vadd.xlane.f32.xlu0 %v1170
  %v1172 = vpop.xlane.xlu0 %1171
  %v1173 = vmul.f32 %v1169, %v555
  %v1174 = vmul.f32 %v1172, %v555
  %v1175 = vsub.f32 %v1165, %v1173
  %v1176 = vsub.f32 %v1166, %v1174
  %v1177 = vmul.f32 %v1175, %v1175
  %v1178 = vmul.f32 %v1176, %v1176
  %v1179 = vsel %vm164, %v1177, 0.0
  %1180 = vadd.xlane.f32.xlu0 %v1179
  %v1181 = vpop.xlane.xlu0 %1180
  %v1182 = vsel %vm164, %v1178, 0.0
  %1183 = vadd.xlane.f32.xlu0 %v1182
  %v1184 = vpop.xlane.xlu0 %1183
  %v1185 = vmul.f32 %v1181, %v555
  %v1186 = vmul.f32 %v1184, %v555
  %v1187 = vadd.f32 %v1185, 1e-05
  %v1188 = vadd.f32 %v1186, 1e-05
  %v1189 = vrsqrt.pop %v1187
  %v1190 = vrsqrt.pop %v1188
  %v1191 = vmul.f32 %v1175, %v1189
  %v1192 = vmul.f32 %v1176, %v1190
  %v1193 = vlaneseq
  %v1194 = vshrl.u32 %v1193, 7
  %v1195 = vsub.s32 0, %v1194
  %v1196 = vrot.slane %v761, %v1195
  %v1197 = vmul.f32 %v1191, %v1196
  %v1198 = vmul.f32 %v1192, %v1196
  %v1199 = vlaneseq
  %v1200 = vshrl.u32 %v1199, 7
  %v1201 = vsub.s32 0, %v1200
  %v1202 = vrot.slane %v762, %v1201
  %v1203 = vadd.f32 %v1197, %v1202
  %v1204 = vadd.f32 %v1198, %v1202
  %v1205 = vpack.c.bf16 %v1204, %v1203
  %v1206 = vlaneseq
  %v1207 = vshrl.u32 %v1206, 7
  %v1208 = vsub.s32 0, %v1207
  %v1209 = vrot.slane %v765, %v1208
  %v1214 = vunpack.c.l.b16 %v755
  %v1215 = vunpack.c.l.b16 %v756
  %v1216 = vunpack.c.l.b16 %v757
  %v1217 = vunpack.c.l.b16 %v758
  %v1218 = vpack.c.b16 %v1215, %v1214
  %v1219 = vpack.c.b16 %v1217, %v1216
  %v1223 = vsel %vm164, %v1205, 0
  %1225 = vmatprep.subr.bf16.mxu0 0
  %1226 = vmatpush1.bf16.msra.mxu0 %v1218
  %1227 = vmatprep.subr.bf16.mxu0 0
  %1228 = vmatpush1.bf16.msra.mxu0 %v1219
  %1229 = vmatprep.subr.bf16.mxu0 0
  %1230 = vmatpush1.bf16.msra.mxu0 0
  %1231 = vmatprep.subr.bf16.mxu0 0
  %1232 = vmatpush1.bf16.msra.mxu0 0
  %1233 = vmatprep.subr.bf16.mxu0 0
  %1234 = vmatpush1.bf16.msra.mxu0 0
  %1235 = vmatprep.subr.bf16.mxu0 0
  %1236 = vmatpush1.bf16.msra.mxu0 0
  %1237 = vmatprep.subr.bf16.mxu0 0
  %1238 = vmatpush1.bf16.msra.mxu0 0
  %1239 = vmatprep.subr.bf16.mxu0 0
  %1240 = vmatpush1.bf16.msra.mxu0 0
  %1241 = vmatprep.subr.bf16.mxu0 0
  %1242 = vmatpush1.bf16.msra.mxu0 0
  %1243 = vmatprep.subr.bf16.mxu0 0
  %1244 = vmatpush1.bf16.msra.mxu0 0
  %1245 = vmatprep.subr.bf16.mxu0 0
  %1246 = vmatpush1.bf16.msra.mxu0 0
  %1247 = vmatprep.subr.bf16.mxu0 0
  %1248 = vmatpush1.bf16.msra.mxu0 0
  %1249 = vmatprep.subr.bf16.mxu0 0
  %1250 = vmatpush1.bf16.msra.mxu0 0
  %1251 = vmatprep.subr.bf16.mxu0 0
  %1252 = vmatpush1.bf16.msra.mxu0 0
  %1253 = vmatprep.subr.bf16.mxu0 0
  %1254 = vmatpush1.bf16.msra.mxu0 0
  %1255 = vmatprep.subr.bf16.mxu0 0
  %1256 = vmatpush1.bf16.msra.mxu0 0
  %1257 = vmatprep.mubr.bf16.mxu0 0
  %1258 = vmatmul.mubr.bf16.gmra.mrb[0].mxu0 %v1223
  %v1259 = vpop.f32.mrb[0].mxu0
  %v1260 = vadd.f32 %v1209, %v1259
  %v1261 = vpop.f32.mrb[0].mxu0
  %v1262 = vpop.f32.mrb[0].mxu0
  %v1263 = vadd.f32 %v1209, %v1262
  %v1264 = vpop.f32.mrb[0].mxu0
  %1265 = vdwg.mxu0
  %v1266 = vmax.f32 %v1260, 0.0
  %v1267 = vmax.f32 %v1263, 0.0
  %v1268 = vpack.c.bf16 %v1267, %v1266
  %v1269 = vlaneseq
  %v1270 = vshrl.u32 %v1269, 7
  %v1271 = vsub.s32 0, %v1270
  %v1272 = vrot.slane %v766, %v1271
  %1273 = vrot.lane.b32.xlu0 %v1218, 64
  %v1274 = vpop.permute.xlu0 %1273
  %1275 = vrot.lane.b32.xlu0 %v1219, 64
  %v1276 = vpop.permute.xlu0 %1275
  %v1278 = vsel %vm660, %v1268, 0
  %v1281 = vsel %vm660, %v1274, 0
  %v1284 = vsel %vm660, %v1276, 0
  %1286 = vmatprep.subr.bf16.mxu0 0
  %1287 = vmatpush1.bf16.xpose.msra.mxu0 %v1281
  %1288 = vmatprep.subr.bf16.mxu0 0
  %1289 = vmatpush1.bf16.xpose.msra.mxu0 %v1284
  %1290 = vmatprep.subr.bf16.mxu0 0
  %1291 = vmatpush1.bf16.xpose.msra.mxu0 0
  %1292 = vmatprep.subr.bf16.mxu0 0
  %1293 = vmatpush1.bf16.xpose.msra.mxu0 0
  %1294 = vmatprep.subr.bf16.mxu0 0
  %1295 = vmatpush1.bf16.xpose.msra.mxu0 0
  %1296 = vmatprep.subr.bf16.mxu0 0
  %1297 = vmatpush1.bf16.xpose.msra.mxu0 0
  %1298 = vmatprep.subr.bf16.mxu0 0
  %1299 = vmatpush1.bf16.xpose.msra.mxu0 0
  %1300 = vmatprep.subr.bf16.mxu0 0
  %1301 = vmatpush1.bf16.xpose.msra.mxu0 0
  %1302 = vmatprep.subr.bf16.mxu0 0
  %1303 = vmatpush1.bf16.xpose.msra.mxu0 0
  %1304 = vmatprep.subr.bf16.mxu0 0
  %1305 = vmatpush1.bf16.xpose.msra.mxu0 0
  %1306 = vmatprep.subr.bf16.mxu0 0
  %1307 = vmatpush1.bf16.xpose.msra.mxu0 0
  %1308 = vmatprep.subr.bf16.mxu0 0
  %1309 = vmatpush1.bf16.xpose.msra.mxu0 0
  %1310 = vmatprep.subr.bf16.mxu0 0
  %1311 = vmatpush1.bf16.xpose.msra.mxu0 0
  %1312 = vmatprep.subr.bf16.mxu0 0
  %1313 = vmatpush1.bf16.xpose.msra.mxu0 0
  %1314 = vmatprep.subr.bf16.mxu0 0
  %1315 = vmatpush1.bf16.xpose.msra.mxu0 0
  %1316 = vmatprep.subr.bf16.mxu0 0
  %1317 = vmatpush1.bf16.xpose.msra.mxu0 0
  %1318 = vmatprep.mubr.bf16.mxu0 0
  %1319 = vmatmul.mubr.bf16.gmra.mrb[0].mxu0 %v1278
  %v1320 = vpop.f32.mrb[0].mxu0
  %v1321 = vadd.f32 %v1272, %v1320
  %v1322 = vpop.f32.mrb[0].mxu0
  %v1323 = vpop.f32.mrb[0].mxu0
  %v1324 = vadd.f32 %v1272, %v1323
  %v1325 = vpop.f32.mrb[0].mxu0
  %1326 = vdwg.mxu0
  %v1327 = vadd.f32 %v1203, %v1321
  %v1328 = vadd.f32 %v1204, %v1324
  %v1329 = vsel %vm164, %v1327, 0.0
  %1330 = vadd.xlane.f32.xlu0 %v1329
  %v1331 = vpop.xlane.xlu0 %1330
  %v1332 = vsel %vm164, %v1328, 0.0
  %1333 = vadd.xlane.f32.xlu0 %v1332
  %v1334 = vpop.xlane.xlu0 %1333
  %v1335 = vmul.f32 %v1331, %v555
  %v1336 = vmul.f32 %v1334, %v555
  %v1337 = vsub.f32 %v1327, %v1335
  %v1338 = vsub.f32 %v1328, %v1336
  %v1339 = vmul.f32 %v1337, %v1337
  %v1340 = vmul.f32 %v1338, %v1338
  %v1341 = vsel %vm164, %v1339, 0.0
  %1342 = vadd.xlane.f32.xlu0 %v1341
  %v1343 = vpop.xlane.xlu0 %1342
  %v1344 = vsel %vm164, %v1340, 0.0
  %1345 = vadd.xlane.f32.xlu0 %v1344
  %v1346 = vpop.xlane.xlu0 %1345
  %v1347 = vmul.f32 %v1343, %v555
  %v1348 = vmul.f32 %v1346, %v555
  %v1349 = vadd.f32 %v1347, 1e-05
  %v1350 = vadd.f32 %v1348, 1e-05
  %v1351 = vrsqrt.pop %v1349
  %v1352 = vrsqrt.pop %v1350
  %v1353 = vmul.f32 %v1337, %v1351
  %v1354 = vmul.f32 %v1338, %v1352
  %v1355 = vlaneseq
  %v1356 = vshrl.u32 %v1355, 7
  %v1357 = vsub.s32 0, %v1356
  %v1358 = vrot.slane %v763, %v1357
  %v1359 = vmul.f32 %v1353, %v1358
  %v1360 = vmul.f32 %v1354, %v1358
  %v1361 = vlaneseq
  %v1362 = vshrl.u32 %v1361, 7
  %v1363 = vsub.s32 0, %v1362
  %v1364 = vrot.slane %v764, %v1363
  %v1365 = vadd.f32 %v1359, %v1364
  %v1366 = vadd.f32 %v1360, %v1364
  %v1367 = vld [vmem:[%s1 + $0x40] sm:$0xf]
  %v1368 = vld [vmem:[%s1 + $0x44] sm:$0xf]
  %v1369 = vld [vmem:[%s1 + $0x48] sm:$0xf]
  %v1370 = vld [vmem:[%s1 + $0x4c] sm:$0xf]
  %v1371 = vpack.c.bf16 %v1366, %v1365
  %v1372 = vld [vmem:[%s2 + $0x10] sm:$0x1]
  %v1373 = vlaneseq
  %v1374 = vshrl.u32 %v1373, 7
  %v1375 = vsub.s32 0, %v1374
  %v1376 = vrot.slane %v1372, %v1375
  %v1381 = vunpack.c.l.b16 %v1367
  %v1382 = vunpack.c.l.b16 %v1368
  %v1383 = vunpack.c.l.b16 %v1369
  %v1384 = vunpack.c.l.b16 %v1370
  %v1385 = vpack.c.b16 %v1382, %v1381
  %v1386 = vpack.c.b16 %v1384, %v1383
  %v1390 = vsel %vm164, %v1371, 0
  %1392 = vmatprep.subr.bf16.mxu0 0
  %1393 = vmatpush1.bf16.msra.mxu0 %v1385
  %1394 = vmatprep.subr.bf16.mxu0 0
  %1395 = vmatpush1.bf16.msra.mxu0 %v1386
  %1396 = vmatprep.subr.bf16.mxu0 0
  %1397 = vmatpush1.bf16.msra.mxu0 0
  %1398 = vmatprep.subr.bf16.mxu0 0
  %1399 = vmatpush1.bf16.msra.mxu0 0
  %1400 = vmatprep.subr.bf16.mxu0 0
  %1401 = vmatpush1.bf16.msra.mxu0 0
  %1402 = vmatprep.subr.bf16.mxu0 0
  %1403 = vmatpush1.bf16.msra.mxu0 0
  %1404 = vmatprep.subr.bf16.mxu0 0
  %1405 = vmatpush1.bf16.msra.mxu0 0
  %1406 = vmatprep.subr.bf16.mxu0 0
  %1407 = vmatpush1.bf16.msra.mxu0 0
  %1408 = vmatprep.subr.bf16.mxu0 0
  %1409 = vmatpush1.bf16.msra.mxu0 0
  %1410 = vmatprep.subr.bf16.mxu0 0
  %1411 = vmatpush1.bf16.msra.mxu0 0
  %1412 = vmatprep.subr.bf16.mxu0 0
  %1413 = vmatpush1.bf16.msra.mxu0 0
  %1414 = vmatprep.subr.bf16.mxu0 0
  %1415 = vmatpush1.bf16.msra.mxu0 0
  %1416 = vmatprep.subr.bf16.mxu0 0
  %1417 = vmatpush1.bf16.msra.mxu0 0
  %1418 = vmatprep.subr.bf16.mxu0 0
  %1419 = vmatpush1.bf16.msra.mxu0 0
  %1420 = vmatprep.subr.bf16.mxu0 0
  %1421 = vmatpush1.bf16.msra.mxu0 0
  %1422 = vmatprep.subr.bf16.mxu0 0
  %1423 = vmatpush1.bf16.msra.mxu0 0
  %1424 = vmatprep.mubr.bf16.mxu0 0
  %1425 = vmatmul.mubr.bf16.gmra.mrb[0].mxu0 %v1390
  %v1426 = vpop.f32.mrb[0].mxu0
  %v1427 = vadd.f32 %v1376, %v1426
  %v1428 = vpop.f32.mrb[0].mxu0
  %v1429 = vpop.f32.mrb[0].mxu0
  %v1430 = vadd.f32 %v1376, %v1429
  %v1431 = vpop.f32.mrb[0].mxu0
  %1432 = vdwg.mxu0
  %1433 = vst [vmem:[%s3] sm:$0xff] %v1427
  %1434 = vst [vmem:[%s3 + $0x8] sm:$0xff] %v1430
  // Predicated region
  $region14: #{forward.1} parent=0 // pred_check
    _
  $region15: #{forward.1} parent=0 // pred_check_branch
    %1436 = sbr.rel (0) target = $region17
  $region16: #{forward.1} parent=0 // pred_region
    _
  $region17: #{forward.1} parent=0 // pred_fallthru
    _
  // Predicated region
  $region18: #{forward.1} parent=0 // pred_check
    _
  $region19: #{forward.1} parent=0 // pred_check_branch
    %1438 = sbr.rel (0) target = $region21
  $region20: #{forward.1} parent=0 // pred_region
    _
  $region21: #{forward.1} parent=0 // pred_fallthru
    _

</llo_original>
